<compile_context>
chip_gen: v7x
topology: tpu7x:2x2x1
jax: 0.10.0
libtpu: 0.0.40
codegen_flags: <defaults>
</compile_context>

<pallas_src>
import functools

import jax
import jax.numpy as jnp
from jax import lax
from jax.experimental import pallas as pl
from jax.experimental.pallas import tpu as pltpu


def _round_up(x, m):
    return ((x + m - 1) // m) * m


def _make_mlp_kernel(num_layers):
    """Kernel computing the whole MLP for one batch tile.

    Input block:  x (tb, d_in)        — native batch-major layout.
    Hidden state: h (features, tb)    — features on sublanes, batch on lanes.
    Output block: (tb, d_out)         — batch-major, no wrapper transpose.
    """

    def kernel(x_ref, *refs):
        w_refs = refs[:num_layers]
        b_ref = refs[num_layers]
        o_ref = refs[num_layers + 1]

        x = x_ref[...].astype(jnp.float32)          # (tb, d_in)
        b_all = b_ref[...]                          # (max_d, num_layers)

        if num_layers == 1:
            w = w_refs[0][...]                      # (d_out, d_in)
            out = lax.dot_general(
                x, w, dimension_numbers=(((1,), (1,)), ((), ())),
                preferred_element_type=jnp.float32)          # (tb, d_out)
            out = out + b_all[: w.shape[0], 0][None, :]
        else:
            # Layer 0: contract w0's d_in against x's last dim -> (d_out0, tb).
            w0 = w_refs[0][...]
            h = lax.dot_general(
                w0, x, dimension_numbers=(((1,), (1,)), ((), ())),
                preferred_element_type=jnp.float32)
            h = jnp.maximum(h + b_all[: w0.shape[0], 0:1], 0.0)

            # Middle layers: standard (d_out, d_in) @ (d_in, tb).
            for i in range(1, num_layers - 1):
                w = w_refs[i][...]
                h = jnp.dot(w, h, preferred_element_type=jnp.float32)
                h = jnp.maximum(h + b_all[: w.shape[0], i : i + 1], 0.0)

            # Last layer (no ReLU): contract on the feature axis of h so the
            # result is already batch-major (tb, d_out) — no in-kernel
            # transpose and no wrapper-side transpose.
            w_last = w_refs[-1][...]                # (d_out, d_in_last)
            out = lax.dot_general(
                h, w_last, dimension_numbers=(((0,), (1,)), ((), ())),
                preferred_element_type=jnp.float32)          # (tb, d_out)
            out = out + b_all[: w_last.shape[0], num_layers - 1][None, :]

        o_ref[...] = out.astype(o_ref.dtype)

    return kernel


def pack_biases(biases):
    """Pack per-layer biases into one resident (max_d, L) array.

    Call once per parameter set (outside the per-call path).
    """
    max_d = max(int(b.shape[0]) for b in biases)
    cols = [jnp.pad(b, (0, max_d - b.shape[0]))[:, None] for b in biases]
    return jnp.concatenate(cols, axis=1).astype(jnp.float32)


@functools.partial(jax.jit, static_argnames=("batch_tile",))
def _fc_forward(x, weights, b_packed, *, batch_tile):
    num_layers = len(weights)
    B, d_in = x.shape
    d_out = weights[-1].shape[0]
    max_d, n_layers_packed = b_packed.shape
    assert n_layers_packed == num_layers

    tb = int(batch_tile)
    assert tb % 128 == 0, "batch_tile must be a multiple of 128 (lane width)"
    Bp = _round_up(B, tb)
    if Bp != B:
        x = jnp.pad(x, ((0, Bp - B), (0, 0)))

    in_specs = [pl.BlockSpec((tb, d_in), lambda i: (i, 0))]      # x streams over batch
    for w in weights:                                            # weights fully resident
        in_specs.append(pl.BlockSpec(w.shape, lambda i: (0, 0)))
    in_specs.append(pl.BlockSpec((max_d, num_layers), lambda i: (0, 0)))
    out_spec = pl.BlockSpec((tb, d_out), lambda i: (i, 0))

    out = pl.pallas_call(
        _make_mlp_kernel(num_layers),
        out_shape=jax.ShapeDtypeStruct((Bp, d_out), x.dtype),
        grid_spec=pltpu.PrefetchScalarGridSpec(
            num_scalar_prefetch=0,
            grid=(Bp // tb,),
            in_specs=in_specs,
            out_specs=out_spec,
        ),
        compiler_params=pltpu.CompilerParams(
            dimension_semantics=("parallel",),     # megacore-shardable on v7x
        ),
    )(x, *weights, b_packed)

    if Bp != B:
        out = out[:B]                              # drop W@0+b garbage rows
    return out


def fc_network_forward(x, weights, b_packed, *, batch_tile=512):
    """Pallas forward for FCNetwork.

    x:        (B, dims[0]) float32
    weights:  list of (dims[i+1], dims[i]) float32  (PyTorch (out, in) layout)
    b_packed: (max_d, num_layers) float32  from pack_biases(biases)
    returns:  (B, dims[-1]) float32
    """
    B = int(x.shape[0])
    # Ragged / small batches: tile sized from the actual batch (lane-aligned).
    tb = min(int(batch_tile), _round_up(B, 128))
    return _fc_forward(x, tuple(weights), b_packed, batch_tile=tb)


def init_fc_params(key, dims):
    """Deterministic PyTorch-style Linear init: U(-1/sqrt(fan_in), +1/sqrt(fan_in))."""
    weights, biases = [], []
    for d_in, d_out in zip(dims[:-1], dims[1:]):
        key, kw, kb = jax.random.split(key, 3)
        bound = 1.0 / jnp.sqrt(jnp.float32(d_in))
        # PyTorch layout: W is (d_out, d_in), b is (d_out,).
        w = jax.random.uniform(kw, (d_out, d_in), jnp.float32, -bound, bound)
        b = jax.random.uniform(kb, (d_out,), jnp.float32, -bound, bound)
        weights.append(w)
        biases.append(b)
    return weights, biases


def fc_reference(x, weights, biases):
    h = x
    for i, (w, b) in enumerate(zip(weights, biases)):
        h = h @ w.T + b
        if i < len(weights) - 1:
            h = jnp.maximum(h, 0.0)
    return h


if __name__ == "__main__":
    # FCNetwork(dims=(32, 64, 64, 5)), out_layer=None
    dims = (32, 64, 64, 5)
    batch = 1024          # default tb=512 -> grid=2: one step per TC on v7x

    key = jax.random.PRNGKey(0)
    key, kx = jax.random.split(key)
    x = jax.random.normal(kx, (batch, dims[0]), jnp.float32)
    weights, biases = init_fc_params(key, dims)
    b_packed = pack_biases(biases)        # once per parameter set, off the hot path

    out = fc_network_forward(x, weights, b_packed)
    out = jax.block_until_ready(out)

    ref = fc_reference(x, weights, biases)
    assert out.shape == (batch, dims[-1])
    assert jnp.allclose(out, ref, atol=1e-4, rtol=1e-4), "mismatch vs reference"

    # Ragged batch exercises the pad-and-slice path with a batch-sized tile.
    x_ragged = x[:300]
    out_r = jax.block_until_ready(fc_network_forward(x_ragged, weights, b_packed))
    ref_r = fc_reference(x_ragged, weights, biases)
    assert out_r.shape == (300, dims[-1])
    assert jnp.allclose(out_r, ref_r, atol=1e-4, rtol=1e-4), "ragged mismatch"

    print("KERNEL_OK")
</pallas_src>

<mosaic_0001>
module attributes {stable_mosaic.version = 11 : i64} {
  func.func @kernel(%arg0: i32, %arg1: memref<512x32xf32, #tpu.memory_space<vmem>>, %arg2: memref<64x32xf32, #tpu.memory_space<vmem>>, %arg3: memref<64x64xf32, #tpu.memory_space<vmem>>, %arg4: memref<5x64xf32, #tpu.memory_space<vmem>>, %arg5: memref<64x3xf32, #tpu.memory_space<vmem>>, %arg6: memref<512x5xf32, #tpu.memory_space<vmem>>) attributes {dimension_semantics = [#tpu.dimension_semantics<parallel>], iteration_bounds = array<i64: 2>, scalar_prefetch = 0 : i64, scratch_operands = 0 : i64, tpu.core_type = #tpu.core_type<tc>, window_params = [{transform_indices = @transform_0, window_bounds = array<i64: 512, 32>}, {pipeline_mode = #tpu.pipeline_mode<synchronous>, transform_indices = @transform_1, window_bounds = array<i64: 64, 32>}, {pipeline_mode = #tpu.pipeline_mode<synchronous>, transform_indices = @transform_2, window_bounds = array<i64: 64, 64>}, {pipeline_mode = #tpu.pipeline_mode<synchronous>, transform_indices = @transform_3, window_bounds = array<i64: 5, 64>}, {pipeline_mode = #tpu.pipeline_mode<synchronous>, transform_indices = @transform_4, window_bounds = array<i64: 64, 3>}, {transform_indices = @transform_5, window_bounds = array<i64: 512, 5>}]} {
    %c0 = arith.constant 0 : index
    %c0_0 = arith.constant 0 : index
    %0 = vector.load %arg1[%c0, %c0_0] : memref<512x32xf32, #tpu.memory_space<vmem>>, vector<512x32xf32>
    %c0_1 = arith.constant 0 : index
    %c0_2 = arith.constant 0 : index
    %1 = vector.load %arg5[%c0_1, %c0_2] : memref<64x3xf32, #tpu.memory_space<vmem>>, vector<64x3xf32>
    %c0_3 = arith.constant 0 : index
    %c0_4 = arith.constant 0 : index
    %2 = vector.load %arg2[%c0_3, %c0_4] : memref<64x32xf32, #tpu.memory_space<vmem>>, vector<64x32xf32>
    %cst = arith.constant dense<0.000000e+00> : vector<64x512xf32>
    %3 = tpu.matmul %2, %0, %cst {dimension_numbers = #tpu.dot_dimension_numbers<[1], [1], [0], [0], [0, 0, 1, 0], [], []>} : vector<64x32xf32>, vector<512x32xf32>, vector<64x512xf32> -> vector<64x512xf32>
    %4 = vector.extract_strided_slice %1 {offsets = [0, 0], sizes = [64, 1], strides = [1, 1]} : vector<64x3xf32> to vector<64x1xf32>
    %5 = vector.broadcast %4 : vector<64x1xf32> to vector<64x512xf32>
    %6 = arith.addf %3, %5 : vector<64x512xf32>
    %cst_5 = arith.constant 0.000000e+00 : f32
    %7 = vector.broadcast %cst_5 : f32 to vector<64x512xf32>
    %8 = arith.maximumf %6, %7 : vector<64x512xf32>
    %c0_6 = arith.constant 0 : index
    %c0_7 = arith.constant 0 : index
    %9 = vector.load %arg3[%c0_6, %c0_7] : memref<64x64xf32, #tpu.memory_space<vmem>>, vector<64x64xf32>
    %cst_8 = arith.constant dense<0.000000e+00> : vector<64x512xf32>
    %10 = tpu.matmul %9, %8, %cst_8 {dimension_numbers = #tpu.dot_dimension_numbers<[1], [0], [0], [1], [0, 0, 1, 1], [], []>} : vector<64x64xf32>, vector<64x512xf32>, vector<64x512xf32> -> vector<64x512xf32>
    %11 = vector.extract_strided_slice %1 {offsets = [0, 1], sizes = [64, 1], strides = [1, 1]} : vector<64x3xf32> to vector<64x1xf32>
    %12 = vector.broadcast %11 : vector<64x1xf32> to vector<64x512xf32>
    %13 = arith.addf %10, %12 : vector<64x512xf32>
    %cst_9 = arith.constant 0.000000e+00 : f32
    %14 = vector.broadcast %cst_9 : f32 to vector<64x512xf32>
    %15 = arith.maximumf %13, %14 : vector<64x512xf32>
    %c0_10 = arith.constant 0 : index
    %c0_11 = arith.constant 0 : index
    %16 = vector.load %arg4[%c0_10, %c0_11] : memref<5x64xf32, #tpu.memory_space<vmem>>, vector<5x64xf32>
    %cst_12 = arith.constant dense<0.000000e+00> : vector<512x5xf32>
    %17 = tpu.matmul %15, %16, %cst_12 {dimension_numbers = #tpu.dot_dimension_numbers<[0], [1], [1], [0], [0, 1, 1, 0], [], []>} : vector<64x512xf32>, vector<5x64xf32>, vector<512x5xf32> -> vector<512x5xf32>
    %18 = vector.extract_strided_slice %1 {offsets = [0, 2], sizes = [5, 1], strides = [1, 1]} : vector<64x3xf32> to vector<5x1xf32>
    %19 = vector.shape_cast %18 : vector<5x1xf32> to vector<5xf32>
    %20 = vector.shape_cast %19 : vector<5xf32> to vector<1x5xf32>
    %21 = vector.broadcast %20 : vector<1x5xf32> to vector<512x5xf32>
    %22 = arith.addf %17, %21 : vector<512x5xf32>
    %c0_13 = arith.constant 0 : index
    %c0_14 = arith.constant 0 : index
    %23 = vector.load %arg6[%c0_13, %c0_14] : memref<512x5xf32, #tpu.memory_space<vmem>>, vector<512x5xf32>
    tpu.vector_store %arg6[%c0_13, %c0_14], %22 {strides = array<i32>} : memref<512x5xf32, #tpu.memory_space<vmem>>, vector<512x5xf32>,
    return
  }
  func.func @transform_0(%arg0: i32) -> (i32, i32) {
    %c0_i32 = arith.constant 0 : i32
    %c0_i32_0 = arith.constant 0 : i32
    return %arg0, %c0_i32 : i32, i32
  }
  func.func @transform_1(%arg0: i32) -> (i32, i32) {
    %c0_i32 = arith.constant 0 : i32
    %c0_i32_0 = arith.constant 0 : i32
    %c0_i32_1 = arith.constant 0 : i32
    return %c0_i32, %c0_i32_0 : i32, i32
  }
  func.func @transform_2(%arg0: i32) -> (i32, i32) {
    %c0_i32 = arith.constant 0 : i32
    %c0_i32_0 = arith.constant 0 : i32
    %c0_i32_1 = arith.constant 0 : i32
    return %c0_i32, %c0_i32_0 : i32, i32
  }
  func.func @transform_3(%arg0: i32) -> (i32, i32) {
    %c0_i32 = arith.constant 0 : i32
    %c0_i32_0 = arith.constant 0 : i32
    %c0_i32_1 = arith.constant 0 : i32
    return %c0_i32, %c0_i32_0 : i32, i32
  }
  func.func @transform_4(%arg0: i32) -> (i32, i32) {
    %c0_i32 = arith.constant 0 : i32
    %c0_i32_0 = arith.constant 0 : i32
    %c0_i32_1 = arith.constant 0 : i32
    return %c0_i32, %c0_i32_0 : i32, i32
  }
  func.func @transform_5(%arg0: i32) -> (i32, i32) {
    %c0_i32 = arith.constant 0 : i32
    %c0_i32_0 = arith.constant 0 : i32
    return %arg0, %c0_i32 : i32, i32
  }
}

</mosaic_0001>

<llo_original>
// kernel: _fc_forward.1
$region0: #{_fc_forward.1}
  #allocation0 [shape = 'u32[]', space=smem, size = 0x4, offset = 0x4, fixed_abs, tag = 'smem constant byte address 0x4 - core index']
  #allocation1 [shape = 'u32[144,128]{1,0:T(1,128)}', space=vmem, size = 0x12000, scoped, tag = 'internal scratch']
  %s0 = inlined_call_operand.vmem [shape: f32[1024,32], index: 0, kind: input, shape index: {}]
  %s1 = inlined_call_operand.vmem [shape: f32[64,32], index: 1, kind: input, shape index: {}]
  %s2 = inlined_call_operand.vmem [shape: f32[64,64], index: 2, kind: input, shape index: {}]
  %s3 = inlined_call_operand.vmem [shape: f32[5,64], index: 3, kind: input, shape index: {}]
  %s4 = inlined_call_operand.vmem [shape: f32[64,3], index: 4, kind: input, shape index: {}]
  %s5 = inlined_call_operand.vmem [shape: f32[1024,5], index: 5, kind: output, shape index: {}]
  %s6 = sld [smem:[#allocation0]]
  $region53: #{_fc_forward.1} parent=0
    _
  %s8 = ssub.s32 1, %s6
  %s9 = scalar_select 0, %s8, %s6
  loop: start=0, step=1, limit=4
  $region2: #{_fc_forward.1} parent=0 // loop_pre_header
    _
  $region3: #{_fc_forward.1} parent=0 // loop_header
    %s11 = sphi 0, %s15
    %p12 = scmp.ge.s32.totalorder %s11, 4
    %s21 = sphi 0, %s23
    %s24 = sphi 0, %s21
    %s25 = sphi 0, %s24
    %s41 = sphi 0, %s25
    %s45 = sphi 0, %s45
    %s47 = sphi 0, %s45
    %s48 = sphi 0, %s47
    %s62 = sphi 0, %s48
    %s66 = sphi 0, %s66
    %s68 = sphi 0, %s66
    %s69 = sphi 0, %s68
    %s83 = sphi 0, %s69
    %s87 = sphi 0, %s87
    %s89 = sphi 0, %s87
    %s90 = sphi 0, %s89
    %s104 = sphi 0, %s90
    %s108 = sphi 0, %s108
    %s110 = sphi 0, %s108
    %s111 = sphi 0, %s110
    %s125 = sphi 0, %s111
    %s131 = sphi 0, %s133
    %s134 = sphi 0, %s131
    %s135 = sphi 0, %s134
    %s151 = sphi 0, %s135
  $region4: #{_fc_forward.1} parent=0 // loop_header_branch
    %14 = sbr.rel (%p12) target = $region8
  $region5: #{_fc_forward.1} parent=0 // loop_body
    %s16 = ssub.s32 %s11, 1
    %s17 = ssub.s32 %s11, 2
    %s18 = sadd.s32 %s11, 1
    %s19 = ssub.s32 %s11, %s18
    %p20 = scmp.eq.s32.totalorder %s19, 0
    %s22 = sadd.s32 %s21, 1
    %s23 = scalar_select %p20, %s21, %s22
    %p26 = pneg %p20
    %p27 = scmp.eq.s32.totalorder %s11, 1
    %p28 = por %p26, %p27
    %p29 = scmp.ne.s32.totalorder %s21, %s24
    %p30 = scmp.eq.s32.totalorder %s11, 0
    %p31 = por %p29, %p30
    %p32 = scmp.ne.s32.totalorder %s21, %s24
    %p33 = scmp.eq.s32.totalorder %s16, 1
    %p34 = por %p32, %p33
    %p35 = scmp.ne.s32.totalorder %s24, %s25
    %p36 = scmp.eq.s32.totalorder %s16, 0
    %p37 = por %p35, %p36
    %p38 = scmp.ne.s32.totalorder %s24, %s25
    %p39 = scmp.eq.s32.totalorder %s17, 1
    %p40 = por %p38, %p39
    %p42 = scmp.ne.s32.totalorder %s25, %s41
    %p43 = scmp.eq.s32.totalorder %s17, 0
    %p44 = por %p42, %p43
    %s46 = sadd.s32 %s45, 1
    %p49 = scmp.eq.s32.totalorder %s11, 1
    %p50 = scmp.ne.s32.totalorder %s45, %s47
    %p51 = scmp.eq.s32.totalorder %s11, 0
    %p52 = por %p50, %p51
    %p53 = scmp.ne.s32.totalorder %s45, %s47
    %p54 = scmp.eq.s32.totalorder %s16, 1
    %p55 = por %p53, %p54
    %p56 = scmp.ne.s32.totalorder %s47, %s48
    %p57 = scmp.eq.s32.totalorder %s16, 0
    %p58 = por %p56, %p57
    %p59 = scmp.ne.s32.totalorder %s47, %s48
    %p60 = scmp.eq.s32.totalorder %s17, 1
    %p61 = por %p59, %p60
    %p63 = scmp.ne.s32.totalorder %s48, %s62
    %p64 = scmp.eq.s32.totalorder %s17, 0
    %p65 = por %p63, %p64
    %s67 = sadd.s32 %s66, 1
    %p70 = scmp.eq.s32.totalorder %s11, 1
    %p71 = scmp.ne.s32.totalorder %s66, %s68
    %p72 = scmp.eq.s32.totalorder %s11, 0
    %p73 = por %p71, %p72
    %p74 = scmp.ne.s32.totalorder %s66, %s68
    %p75 = scmp.eq.s32.totalorder %s16, 1
    %p76 = por %p74, %p75
    %p77 = scmp.ne.s32.totalorder %s68, %s69
    %p78 = scmp.eq.s32.totalorder %s16, 0
    %p79 = por %p77, %p78
    %p80 = scmp.ne.s32.totalorder %s68, %s69
    %p81 = scmp.eq.s32.totalorder %s17, 1
    %p82 = por %p80, %p81
    %p84 = scmp.ne.s32.totalorder %s69, %s83
    %p85 = scmp.eq.s32.totalorder %s17, 0
    %p86 = por %p84, %p85
    %s88 = sadd.s32 %s87, 1
    %p91 = scmp.eq.s32.totalorder %s11, 1
    %p92 = scmp.ne.s32.totalorder %s87, %s89
    %p93 = scmp.eq.s32.totalorder %s11, 0
    %p94 = por %p92, %p93
    %p95 = scmp.ne.s32.totalorder %s87, %s89
    %p96 = scmp.eq.s32.totalorder %s16, 1
    %p97 = por %p95, %p96
    %p98 = scmp.ne.s32.totalorder %s89, %s90
    %p99 = scmp.eq.s32.totalorder %s16, 0
    %p100 = por %p98, %p99
    %p101 = scmp.ne.s32.totalorder %s89, %s90
    %p102 = scmp.eq.s32.totalorder %s17, 1
    %p103 = por %p101, %p102
    %p105 = scmp.ne.s32.totalorder %s90, %s104
    %p106 = scmp.eq.s32.totalorder %s17, 0
    %p107 = por %p105, %p106
    %s109 = sadd.s32 %s108, 1
    %p112 = scmp.eq.s32.totalorder %s11, 1
    %p113 = scmp.ne.s32.totalorder %s108, %s110
    %p114 = scmp.eq.s32.totalorder %s11, 0
    %p115 = por %p113, %p114
    %p116 = scmp.ne.s32.totalorder %s108, %s110
    %p117 = scmp.eq.s32.totalorder %s16, 1
    %p118 = por %p116, %p117
    %p119 = scmp.ne.s32.totalorder %s110, %s111
    %p120 = scmp.eq.s32.totalorder %s16, 0
    %p121 = por %p119, %p120
    %p122 = scmp.ne.s32.totalorder %s110, %s111
    %p123 = scmp.eq.s32.totalorder %s17, 1
    %p124 = por %p122, %p123
    %p126 = scmp.ne.s32.totalorder %s111, %s125
    %p127 = scmp.eq.s32.totalorder %s17, 0
    %p128 = por %p126, %p127
    %s129 = ssub.s32 %s11, %s18
    %p130 = scmp.eq.s32.totalorder %s129, 0
    %s132 = sadd.s32 %s131, 1
    %s133 = scalar_select %p130, %s131, %s132
    %p136 = pneg %p130
    %p137 = scmp.eq.s32.totalorder %s11, 1
    %p138 = por %p136, %p137
    %p139 = scmp.ne.s32.totalorder %s131, %s134
    %p140 = scmp.eq.s32.totalorder %s11, 0
    %p141 = por %p139, %p140
    %p142 = scmp.ne.s32.totalorder %s131, %s134
    %p143 = scmp.eq.s32.totalorder %s16, 1
    %p144 = por %p142, %p143
    %p145 = scmp.ne.s32.totalorder %s134, %s135
    %p146 = scmp.eq.s32.totalorder %s16, 0
    %p147 = por %p145, %p146
    %p148 = scmp.ne.s32.totalorder %s134, %s135
    %p149 = scmp.eq.s32.totalorder %s17, 1
    %p150 = por %p148, %p149
    %p152 = scmp.ne.s32.totalorder %s135, %s151
    %p153 = scmp.eq.s32.totalorder %s17, 0
    %p154 = por %p152, %p153
    %p155 = scmp.le.s32.totalorder 1, %s11
    %p156 = scmp.lt.s32.totalorder %s11, 3
    %p157 = pnand %p155, %p156
    %p158 = pneg %p157
    // Predicated region
    $region9: #{_fc_forward.1} parent=5 // pred_check
      _
    $region10: #{_fc_forward.1} parent=5 // pred_check_branch
      %160 = sbr.rel (%p157) target = $region12
    $region11: #{_fc_forward.1} parent=5 // pred_region
      %s161 = ssub.s32 %s11, 1
      // Predicated region
      $region13: #{_fc_forward.1} parent=11 // pred_check
        %p162 = pneg %p58
      $region14: #{_fc_forward.1} parent=11 // pred_check_branch
        %164 = sbr.rel (%p162) target = $region16
      $region15: #{_fc_forward.1} parent=11 // pred_region
        _
      $region16: #{_fc_forward.1} parent=11 // pred_fallthru
        _
      // Predicated region
      $region17: #{_fc_forward.1} parent=11 // pred_check
        %p165 = pneg %p79
      $region18: #{_fc_forward.1} parent=11 // pred_check_branch
        %167 = sbr.rel (%p165) target = $region20
      $region19: #{_fc_forward.1} parent=11 // pred_region
        _
      $region20: #{_fc_forward.1} parent=11 // pred_fallthru
        _
      // Predicated region
      $region21: #{_fc_forward.1} parent=11 // pred_check
        %p168 = pneg %p100
      $region22: #{_fc_forward.1} parent=11 // pred_check_branch
        %170 = sbr.rel (%p168) target = $region24
      $region23: #{_fc_forward.1} parent=11 // pred_region
        _
      $region24: #{_fc_forward.1} parent=11 // pred_fallthru
        _
      // Predicated region
      $region25: #{_fc_forward.1} parent=11 // pred_check
        %p171 = pneg %p121
      $region26: #{_fc_forward.1} parent=11 // pred_check_branch
        %173 = sbr.rel (%p171) target = $region28
      $region27: #{_fc_forward.1} parent=11 // pred_region
        _
      $region28: #{_fc_forward.1} parent=11 // pred_fallthru
        _
    $region12: #{_fc_forward.1} parent=5 // pred_fallthru
      _
    %p174 = scmp.lt.s32.totalorder %s11, 2
    // Predicated region
    $region29: #{_fc_forward.1} parent=5 // pred_check
      %p175 = pneg %p174
    $region30: #{_fc_forward.1} parent=5 // pred_check_branch
      %177 = sbr.rel (%p175) target = $region32
    $region31: #{_fc_forward.1} parent=5 // pred_region
      // Predicated region
      $region33: #{_fc_forward.1} parent=31 // pred_check
        %p178 = pneg %p31
      $region34: #{_fc_forward.1} parent=31 // pred_check_branch
        %180 = sbr.rel (%p178) target = $region36
      $region35: #{_fc_forward.1} parent=31 // pred_region
        %s181 = smul.u32 64, %s11
        %p182 = scmp.lt.s32.totalorder %s181, 127
        %s183 = scalar_select %p182, %s181, 127
        %s184 = smul.addr %s183, 8
        %s185 = scalar_lea.vmem %s0, %s184
        %s186 = smul.u32 64, %s11
      $region36: #{_fc_forward.1} parent=31 // pred_fallthru
        _
    $region32: #{_fc_forward.1} parent=5 // pred_fallthru
      _
    %p187 = scmp.le.s32.totalorder 1, %s11
    %p188 = scmp.lt.s32.totalorder %s11, 3
    %p189 = pnand %p187, %p188
    %p190 = pneg %p189
    // Predicated region
    $region37: #{_fc_forward.1} parent=5 // pred_check
      _
    $region38: #{_fc_forward.1} parent=5 // pred_check_branch
      %192 = sbr.rel (%p189) target = $region40
    $region39: #{_fc_forward.1} parent=5 // pred_region
      %s193 = ssub.s32 %s11, 1
      %s194 = smul.u32 64, %s16
      %p195 = scmp.lt.s32.totalorder %s194, 127
      %s196 = scalar_select %p195, %s194, 127
      %s197 = smul.addr %s196, 8
      %s198 = scalar_lea.vmem %s0, %s197
      %p199 = pneg %p37
      %p200 = pneg %p34
      %p201 = pneg %p58
      %p202 = pneg %p55
      %p203 = pneg %p79
      %p204 = pneg %p76
      %p205 = pneg %p100
      %p206 = pneg %p97
      %p207 = pneg %p121
      %p208 = pneg %p118
      %p209 = pneg %p147
      %p210 = pneg %p144
      %s211 = smul.u32 64, %s16
      %p212 = scmp.lt.s32.totalorder %s211, 127
      %s213 = scalar_select %p212, %s211, 127
      %s214 = smul.addr %s213, 8
      %s215 = scalar_lea.vmem %s5, %s214
      %s216 = smul.u32 64, %s16
      %p217 = scmp.lt.s32.totalorder %s216, 127
      %s218 = scalar_select %p217, %s216, 127
      %s219 = smul.addr %s218, 8
      %s220 = scalar_lea.vmem %s0, %s219
      %s221 = smul.u32 64, %s16
      %s222 = smul.u32 64, %s16
      %p223 = scmp.lt.s32.totalorder %s222, 127
      %s224 = scalar_select %p223, %s222, 127
      %s225 = smul.addr %s224, 8
      %s226 = scalar_lea.vmem %s5, %s225
      %s227 = smul.u32 64, %s16
      %v228 = vld [vmem:[%s220] sm:$0xff]
      %v229 = vld [vmem:[%s220 + $0x8] sm:$0xff]
      %v230 = vld [vmem:[%s220 + $0x10] sm:$0xff]
      %v231 = vld [vmem:[%s220 + $0x18] sm:$0xff]
      %v232 = vld [vmem:[%s220 + $0x20] sm:$0xff]
      %v233 = vld [vmem:[%s220 + $0x28] sm:$0xff]
      %v234 = vld [vmem:[%s220 + $0x30] sm:$0xff]
      %v235 = vld [vmem:[%s220 + $0x38] sm:$0xff]
      %v236 = vld [vmem:[%s220 + $0x40] sm:$0xff]
      %v237 = vld [vmem:[%s220 + $0x48] sm:$0xff]
      %v238 = vld [vmem:[%s220 + $0x50] sm:$0xff]
      %v239 = vld [vmem:[%s220 + $0x58] sm:$0xff]
      %v240 = vld [vmem:[%s220 + $0x60] sm:$0xff]
      %v241 = vld [vmem:[%s220 + $0x68] sm:$0xff]
      %v242 = vld [vmem:[%s220 + $0x70] sm:$0xff]
      %v243 = vld [vmem:[%s220 + $0x78] sm:$0xff]
      %v244 = vld [vmem:[%s220 + $0x80] sm:$0xff]
      %v245 = vld [vmem:[%s220 + $0x88] sm:$0xff]
      %v246 = vld [vmem:[%s220 + $0x90] sm:$0xff]
      %v247 = vld [vmem:[%s220 + $0x98] sm:$0xff]
      %v248 = vld [vmem:[%s220 + $0xa0] sm:$0xff]
      %v249 = vld [vmem:[%s220 + $0xa8] sm:$0xff]
      %v250 = vld [vmem:[%s220 + $0xb0] sm:$0xff]
      %v251 = vld [vmem:[%s220 + $0xb8] sm:$0xff]
      %v252 = vld [vmem:[%s220 + $0xc0] sm:$0xff]
      %v253 = vld [vmem:[%s220 + $0xc8] sm:$0xff]
      %v254 = vld [vmem:[%s220 + $0xd0] sm:$0xff]
      %v255 = vld [vmem:[%s220 + $0xd8] sm:$0xff]
      %v256 = vld [vmem:[%s220 + $0xe0] sm:$0xff]
      %v257 = vld [vmem:[%s220 + $0xe8] sm:$0xff]
      %v258 = vld [vmem:[%s220 + $0xf0] sm:$0xff]
      %v259 = vld [vmem:[%s220 + $0xf8] sm:$0xff]
      %v260 = vld [vmem:[%s220 + $0x100] sm:$0xff]
      %v261 = vld [vmem:[%s220 + $0x108] sm:$0xff]
      %v262 = vld [vmem:[%s220 + $0x110] sm:$0xff]
      %v263 = vld [vmem:[%s220 + $0x118] sm:$0xff]
      %v264 = vld [vmem:[%s220 + $0x120] sm:$0xff]
      %v265 = vld [vmem:[%s220 + $0x128] sm:$0xff]
      %v266 = vld [vmem:[%s220 + $0x130] sm:$0xff]
      %v267 = vld [vmem:[%s220 + $0x138] sm:$0xff]
      %v268 = vld [vmem:[%s220 + $0x140] sm:$0xff]
      %v269 = vld [vmem:[%s220 + $0x148] sm:$0xff]
      %v270 = vld [vmem:[%s220 + $0x150] sm:$0xff]
      %v271 = vld [vmem:[%s220 + $0x158] sm:$0xff]
      %v272 = vld [vmem:[%s220 + $0x160] sm:$0xff]
      %v273 = vld [vmem:[%s220 + $0x168] sm:$0xff]
      %v274 = vld [vmem:[%s220 + $0x170] sm:$0xff]
      %v275 = vld [vmem:[%s220 + $0x178] sm:$0xff]
      %v276 = vld [vmem:[%s220 + $0x180] sm:$0xff]
      %v277 = vld [vmem:[%s220 + $0x188] sm:$0xff]
      %v278 = vld [vmem:[%s220 + $0x190] sm:$0xff]
      %v279 = vld [vmem:[%s220 + $0x198] sm:$0xff]
      %v280 = vld [vmem:[%s220 + $0x1a0] sm:$0xff]
      %v281 = vld [vmem:[%s220 + $0x1a8] sm:$0xff]
      %v282 = vld [vmem:[%s220 + $0x1b0] sm:$0xff]
      %v283 = vld [vmem:[%s220 + $0x1b8] sm:$0xff]
      %v284 = vld [vmem:[%s220 + $0x1c0] sm:$0xff]
      %v285 = vld [vmem:[%s220 + $0x1c8] sm:$0xff]
      %v286 = vld [vmem:[%s220 + $0x1d0] sm:$0xff]
      %v287 = vld [vmem:[%s220 + $0x1d8] sm:$0xff]
      %v288 = vld [vmem:[%s220 + $0x1e0] sm:$0xff]
      %v289 = vld [vmem:[%s220 + $0x1e8] sm:$0xff]
      %v290 = vld [vmem:[%s220 + $0x1f0] sm:$0xff]
      %v291 = vld [vmem:[%s220 + $0x1f8] sm:$0xff]
      %v292 = vld [vmem:[%s4] sm:$0xff]
      %v293 = vld [vmem:[%s4 + $0x8] sm:$0xff]
      %v294 = vld [vmem:[%s4 + $0x10] sm:$0xff]
      %v295 = vld [vmem:[%s4 + $0x18] sm:$0xff]
      %v296 = vld [vmem:[%s4 + $0x20] sm:$0xff]
      %v297 = vld [vmem:[%s4 + $0x28] sm:$0xff]
      %v298 = vld [vmem:[%s4 + $0x30] sm:$0xff]
      %v299 = vld [vmem:[%s4 + $0x38] sm:$0xff]
      %v300 = vld [vmem:[%s1] sm:$0xff]
      %v301 = vld [vmem:[%s1 + $0x8] sm:$0xff]
      %v302 = vld [vmem:[%s1 + $0x10] sm:$0xff]
      %v303 = vld [vmem:[%s1 + $0x18] sm:$0xff]
      %v304 = vld [vmem:[%s1 + $0x20] sm:$0xff]
      %v305 = vld [vmem:[%s1 + $0x28] sm:$0xff]
      %v306 = vld [vmem:[%s1 + $0x30] sm:$0xff]
      %v307 = vld [vmem:[%s1 + $0x38] sm:$0xff]
      %309 = vset.pattern.permute.xlu0 0
      %310 = vperm.xlu0 %309, %v292
      %v311 = vpop.permute.xlu0 %310
      %314 = vset.pattern.permute.xlu0 0
      %315 = vperm.xlu0 %314, %v293
      %v316 = vpop.permute.xlu0 %315
      %319 = vset.pattern.permute.xlu0 0
      %320 = vperm.xlu0 %319, %v294
      %v321 = vpop.permute.xlu0 %320
      %324 = vset.pattern.permute.xlu0 0
      %325 = vperm.xlu0 %324, %v295
      %v326 = vpop.permute.xlu0 %325
      %329 = vset.pattern.permute.xlu0 0
      %330 = vperm.xlu0 %329, %v296
      %v331 = vpop.permute.xlu0 %330
      %334 = vset.pattern.permute.xlu0 0
      %335 = vperm.xlu0 %334, %v297
      %v336 = vpop.permute.xlu0 %335
      %339 = vset.pattern.permute.xlu0 0
      %340 = vperm.xlu0 %339, %v298
      %v341 = vpop.permute.xlu0 %340
      %344 = vset.pattern.permute.xlu0 0
      %345 = vperm.xlu0 %344, %v299
      %v346 = vpop.permute.xlu0 %345
      %vm348 = vcmask 261120
      %v350 = vsel %vm348, %v300, 0
      %v353 = vsel %vm348, %v301, 0
      %v356 = vsel %vm348, %v302, 0
      %v359 = vsel %vm348, %v303, 0
      %v362 = vsel %vm348, %v304, 0
      %v365 = vsel %vm348, %v305, 0
      %v368 = vsel %vm348, %v306, 0
      %v371 = vsel %vm348, %v307, 0
      %v374 = vsel %vm348, %v228, 0
      %v377 = vsel %vm348, %v229, 0
      %v380 = vsel %vm348, %v230, 0
      %v383 = vsel %vm348, %v231, 0
      %v386 = vsel %vm348, %v232, 0
      %v389 = vsel %vm348, %v233, 0
      %v392 = vsel %vm348, %v234, 0
      %v395 = vsel %vm348, %v235, 0
      %v398 = vsel %vm348, %v236, 0
      %v401 = vsel %vm348, %v237, 0
      %v404 = vsel %vm348, %v238, 0
      %v407 = vsel %vm348, %v239, 0
      %v410 = vsel %vm348, %v240, 0
      %v413 = vsel %vm348, %v241, 0
      %v416 = vsel %vm348, %v242, 0
      %v419 = vsel %vm348, %v243, 0
      %v422 = vsel %vm348, %v244, 0
      %v425 = vsel %vm348, %v245, 0
      %v428 = vsel %vm348, %v246, 0
      %v431 = vsel %vm348, %v247, 0
      %v434 = vsel %vm348, %v248, 0
      %v437 = vsel %vm348, %v249, 0
      %v440 = vsel %vm348, %v250, 0
      %v443 = vsel %vm348, %v251, 0
      %v446 = vsel %vm348, %v252, 0
      %v449 = vsel %vm348, %v253, 0
      %v452 = vsel %vm348, %v254, 0
      %v455 = vsel %vm348, %v255, 0
      %v458 = vsel %vm348, %v256, 0
      %v461 = vsel %vm348, %v257, 0
      %v464 = vsel %vm348, %v258, 0
      %v467 = vsel %vm348, %v259, 0
      %v470 = vsel %vm348, %v260, 0
      %v473 = vsel %vm348, %v261, 0
      %v476 = vsel %vm348, %v262, 0
      %v479 = vsel %vm348, %v263, 0
      %v482 = vsel %vm348, %v264, 0
      %v485 = vsel %vm348, %v265, 0
      %v488 = vsel %vm348, %v266, 0
      %v491 = vsel %vm348, %v267, 0
      %v494 = vsel %vm348, %v268, 0
      %v497 = vsel %vm348, %v269, 0
      %v500 = vsel %vm348, %v270, 0
      %v503 = vsel %vm348, %v271, 0
      %v506 = vsel %vm348, %v272, 0
      %v509 = vsel %vm348, %v273, 0
      %v512 = vsel %vm348, %v274, 0
      %v515 = vsel %vm348, %v275, 0
      %v518 = vsel %vm348, %v276, 0
      %v521 = vsel %vm348, %v277, 0
      %v524 = vsel %vm348, %v278, 0
      %v527 = vsel %vm348, %v279, 0
      %v530 = vsel %vm348, %v280, 0
      %v533 = vsel %vm348, %v281, 0
      %v536 = vsel %vm348, %v282, 0
      %v539 = vsel %vm348, %v283, 0
      %v542 = vsel %vm348, %v284, 0
      %v545 = vsel %vm348, %v285, 0
      %v548 = vsel %vm348, %v286, 0
      %v551 = vsel %vm348, %v287, 0
      %v554 = vsel %vm348, %v288, 0
      %v557 = vsel %vm348, %v289, 0
      %v560 = vsel %vm348, %v290, 0
      %v563 = vsel %vm348, %v291, 0
      %565 = vmatprep.subr.mxu0 0.0
      %566 = vmatpush1.xpose.msra.mxu0 %v374
      %567 = vmatprep.subr.mxu0 0.0
      %568 = vmatpush1.xpose.msra.mxu0 %v377
      %569 = vmatprep.subr.mxu0 0.0
      %570 = vmatpush1.xpose.msra.mxu0 %v380
      %571 = vmatprep.subr.mxu0 0.0
      %572 = vmatpush1.xpose.msra.mxu0 %v383
      %573 = vmatprep.subr.mxu0 0.0
      %574 = vmatpush1.xpose.msra.mxu0 %v386
      %575 = vmatprep.subr.mxu0 0.0
      %576 = vmatpush1.xpose.msra.mxu0 %v389
      %577 = vmatprep.subr.mxu0 0.0
      %578 = vmatpush1.xpose.msra.mxu0 %v392
      %579 = vmatprep.subr.mxu0 0.0
      %580 = vmatpush1.xpose.msra.mxu0 %v395
      %581 = vmatprep.subr.mxu0 0.0
      %582 = vmatpush1.xpose.msra.mxu0 %v398
      %583 = vmatprep.subr.mxu0 0.0
      %584 = vmatpush1.xpose.msra.mxu0 %v401
      %585 = vmatprep.subr.mxu0 0.0
      %586 = vmatpush1.xpose.msra.mxu0 %v404
      %587 = vmatprep.subr.mxu0 0.0
      %588 = vmatpush1.xpose.msra.mxu0 %v407
      %589 = vmatprep.subr.mxu0 0.0
      %590 = vmatpush1.xpose.msra.mxu0 %v410
      %591 = vmatprep.subr.mxu0 0.0
      %592 = vmatpush1.xpose.msra.mxu0 %v413
      %593 = vmatprep.subr.mxu0 0.0
      %594 = vmatpush1.xpose.msra.mxu0 %v416
      %595 = vmatprep.subr.mxu0 0.0
      %596 = vmatpush1.xpose.msra.mxu0 %v419
      %597 = vmatprep.subr.mxu0 0.0
      %598 = vmatpush1.xpose.msra.mxu0 %v422
      %599 = vmatprep.subr.mxu0 0.0
      %600 = vmatpush1.xpose.msra.mxu0 %v425
      %601 = vmatprep.subr.mxu0 0.0
      %602 = vmatpush1.xpose.msra.mxu0 %v428
      %603 = vmatprep.subr.mxu0 0.0
      %604 = vmatpush1.xpose.msra.mxu0 %v431
      %605 = vmatprep.subr.mxu0 0.0
      %606 = vmatpush1.xpose.msra.mxu0 %v434
      %607 = vmatprep.subr.mxu0 0.0
      %608 = vmatpush1.xpose.msra.mxu0 %v437
      %609 = vmatprep.subr.mxu0 0.0
      %610 = vmatpush1.xpose.msra.mxu0 %v440
      %611 = vmatprep.subr.mxu0 0.0
      %612 = vmatpush1.xpose.msra.mxu0 %v443
      %613 = vmatprep.subr.mxu0 0.0
      %614 = vmatpush1.xpose.msra.mxu0 %v446
      %615 = vmatprep.subr.mxu0 0.0
      %616 = vmatpush1.xpose.msra.mxu0 %v449
      %617 = vmatprep.subr.mxu0 0.0
      %618 = vmatpush1.xpose.msra.mxu0 %v452
      %619 = vmatprep.subr.mxu0 0.0
      %620 = vmatpush1.xpose.msra.mxu0 %v455
      %621 = vmatprep.subr.mxu0 0.0
      %622 = vmatpush1.xpose.msra.mxu0 %v458
      %623 = vmatprep.subr.mxu0 0.0
      %624 = vmatpush1.xpose.msra.mxu0 %v461
      %625 = vmatprep.subr.mxu0 0.0
      %626 = vmatpush1.xpose.msra.mxu0 %v464
      %627 = vmatprep.subr.mxu0 0.0
      %628 = vmatpush1.xpose.msra.mxu0 %v467
      %629 = vmatprep.mubr.f32.mxu0 0.0
      %630 = vmatmul.mubr.f32.gmra.mrb[0].mxu0 %v350
      %v631 = vpop.f32.mrb[0].mxu0
      %v632 = vadd.f32 %v311, %v631
      %v633 = vpop.f32.mrb[0].mxu0
      %v634 = vadd.f32 %v311, %v633
      %635 = vmatprep.mubr.f32.mxu0 0.0
      %636 = vmatmul.mubr.f32.gmra.mrb[0].mxu0 %v353
      %v637 = vpop.f32.mrb[0].mxu0
      %v638 = vadd.f32 %v316, %v637
      %v639 = vpop.f32.mrb[0].mxu0
      %v640 = vadd.f32 %v316, %v639
      %641 = vmatprep.mubr.f32.mxu0 0.0
      %642 = vmatmul.mubr.f32.gmra.mrb[0].mxu0 %v356
      %v643 = vpop.f32.mrb[0].mxu0
      %v644 = vadd.f32 %v321, %v643
      %v645 = vpop.f32.mrb[0].mxu0
      %v646 = vadd.f32 %v321, %v645
      %647 = vmatprep.mubr.f32.mxu0 0.0
      %648 = vmatmul.mubr.f32.gmra.mrb[0].mxu0 %v359
      %v649 = vpop.f32.mrb[0].mxu0
      %v650 = vadd.f32 %v326, %v649
      %v651 = vpop.f32.mrb[0].mxu0
      %v652 = vadd.f32 %v326, %v651
      %653 = vmatprep.mubr.f32.mxu0 0.0
      %654 = vmatmul.mubr.f32.gmra.mrb[0].mxu0 %v362
      %v655 = vpop.f32.mrb[0].mxu0
      %v656 = vadd.f32 %v331, %v655
      %v657 = vpop.f32.mrb[0].mxu0
      %v658 = vadd.f32 %v331, %v657
      %659 = vmatprep.mubr.f32.mxu0 0.0
      %660 = vmatmul.mubr.f32.gmra.mrb[0].mxu0 %v365
      %v661 = vpop.f32.mrb[0].mxu0
      %v662 = vadd.f32 %v336, %v661
      %v663 = vpop.f32.mrb[0].mxu0
      %v664 = vadd.f32 %v336, %v663
      %665 = vmatprep.mubr.f32.mxu0 0.0
      %666 = vmatmul.mubr.f32.gmra.mrb[0].mxu0 %v368
      %v667 = vpop.f32.mrb[0].mxu0
      %v668 = vadd.f32 %v341, %v667
      %v669 = vpop.f32.mrb[0].mxu0
      %v670 = vadd.f32 %v341, %v669
      %671 = vmatprep.mubr.f32.mxu0 0.0
      %672 = vmatmul.mubr.f32.gmra.mrb[0].mxu0 %v371
      %v673 = vpop.f32.mrb[0].mxu0
      %v674 = vadd.f32 %v346, %v673
      %v675 = vpop.f32.mrb[0].mxu0
      %v676 = vadd.f32 %v346, %v675
      %677 = vdwg.mxu0
      %678 = vmatprep.subr.mxu0 0.0
      %679 = vmatpush1.xpose.msra.mxu0 %v470
      %680 = vmatprep.subr.mxu0 0.0
      %681 = vmatpush1.xpose.msra.mxu0 %v473
      %682 = vmatprep.subr.mxu0 0.0
      %683 = vmatpush1.xpose.msra.mxu0 %v476
      %684 = vmatprep.subr.mxu0 0.0
      %685 = vmatpush1.xpose.msra.mxu0 %v479
      %686 = vmatprep.subr.mxu0 0.0
      %687 = vmatpush1.xpose.msra.mxu0 %v482
      %688 = vmatprep.subr.mxu0 0.0
      %689 = vmatpush1.xpose.msra.mxu0 %v485
      %690 = vmatprep.subr.mxu0 0.0
      %691 = vmatpush1.xpose.msra.mxu0 %v488
      %692 = vmatprep.subr.mxu0 0.0
      %693 = vmatpush1.xpose.msra.mxu0 %v491
      %694 = vmatprep.subr.mxu0 0.0
      %695 = vmatpush1.xpose.msra.mxu0 %v494
      %696 = vmatprep.subr.mxu0 0.0
      %697 = vmatpush1.xpose.msra.mxu0 %v497
      %698 = vmatprep.subr.mxu0 0.0
      %699 = vmatpush1.xpose.msra.mxu0 %v500
      %700 = vmatprep.subr.mxu0 0.0
      %701 = vmatpush1.xpose.msra.mxu0 %v503
      %702 = vmatprep.subr.mxu0 0.0
      %703 = vmatpush1.xpose.msra.mxu0 %v506
      %704 = vmatprep.subr.mxu0 0.0
      %705 = vmatpush1.xpose.msra.mxu0 %v509
      %706 = vmatprep.subr.mxu0 0.0
      %707 = vmatpush1.xpose.msra.mxu0 %v512
      %708 = vmatprep.subr.mxu0 0.0
      %709 = vmatpush1.xpose.msra.mxu0 %v515
      %710 = vmatprep.subr.mxu0 0.0
      %711 = vmatpush1.xpose.msra.mxu0 %v518
      %712 = vmatprep.subr.mxu0 0.0
      %713 = vmatpush1.xpose.msra.mxu0 %v521
      %714 = vmatprep.subr.mxu0 0.0
      %715 = vmatpush1.xpose.msra.mxu0 %v524
      %716 = vmatprep.subr.mxu0 0.0
      %717 = vmatpush1.xpose.msra.mxu0 %v527
      %718 = vmatprep.subr.mxu0 0.0
      %719 = vmatpush1.xpose.msra.mxu0 %v530
      %720 = vmatprep.subr.mxu0 0.0
      %721 = vmatpush1.xpose.msra.mxu0 %v533
      %722 = vmatprep.subr.mxu0 0.0
      %723 = vmatpush1.xpose.msra.mxu0 %v536
      %724 = vmatprep.subr.mxu0 0.0
      %725 = vmatpush1.xpose.msra.mxu0 %v539
      %726 = vmatprep.subr.mxu0 0.0
      %727 = vmatpush1.xpose.msra.mxu0 %v542
      %728 = vmatprep.subr.mxu0 0.0
      %729 = vmatpush1.xpose.msra.mxu0 %v545
      %730 = vmatprep.subr.mxu0 0.0
      %731 = vmatpush1.xpose.msra.mxu0 %v548
      %732 = vmatprep.subr.mxu0 0.0
      %733 = vmatpush1.xpose.msra.mxu0 %v551
      %734 = vmatprep.subr.mxu0 0.0
      %735 = vmatpush1.xpose.msra.mxu0 %v554
      %736 = vmatprep.subr.mxu0 0.0
      %737 = vmatpush1.xpose.msra.mxu0 %v557
      %738 = vmatprep.subr.mxu0 0.0
      %739 = vmatpush1.xpose.msra.mxu0 %v560
      %740 = vmatprep.subr.mxu0 0.0
      %741 = vmatpush1.xpose.msra.mxu0 %v563
      %742 = vmatprep.mubr.f32.mxu0 0.0
      %743 = vmatmul.mubr.f32.gmra.mrb[0].mxu0 %v350
      %v744 = vpop.f32.mrb[0].mxu0
      %v745 = vadd.f32 %v311, %v744
      %v746 = vpop.f32.mrb[0].mxu0
      %v747 = vadd.f32 %v311, %v746
      %748 = vmatprep.mubr.f32.mxu0 0.0
      %749 = vmatmul.mubr.f32.gmra.mrb[0].mxu0 %v353
      %v750 = vpop.f32.mrb[0].mxu0
      %v751 = vadd.f32 %v316, %v750
      %v752 = vpop.f32.mrb[0].mxu0
      %v753 = vadd.f32 %v316, %v752
      %754 = vmatprep.mubr.f32.mxu0 0.0
      %755 = vmatmul.mubr.f32.gmra.mrb[0].mxu0 %v356
      %v756 = vpop.f32.mrb[0].mxu0
      %v757 = vadd.f32 %v321, %v756
      %v758 = vpop.f32.mrb[0].mxu0
      %v759 = vadd.f32 %v321, %v758
      %760 = vmatprep.mubr.f32.mxu0 0.0
      %761 = vmatmul.mubr.f32.gmra.mrb[0].mxu0 %v359
      %v762 = vpop.f32.mrb[0].mxu0
      %v763 = vadd.f32 %v326, %v762
      %v764 = vpop.f32.mrb[0].mxu0
      %v765 = vadd.f32 %v326, %v764
      %766 = vmatprep.mubr.f32.mxu0 0.0
      %767 = vmatmul.mubr.f32.gmra.mrb[0].mxu0 %v362
      %v768 = vpop.f32.mrb[0].mxu0
      %v769 = vadd.f32 %v331, %v768
      %v770 = vpop.f32.mrb[0].mxu0
      %v771 = vadd.f32 %v331, %v770
      %772 = vmatprep.mubr.f32.mxu0 0.0
      %773 = vmatmul.mubr.f32.gmra.mrb[0].mxu0 %v365
      %v774 = vpop.f32.mrb[0].mxu0
      %v775 = vadd.f32 %v336, %v774
      %v776 = vpop.f32.mrb[0].mxu0
      %v777 = vadd.f32 %v336, %v776
      %778 = vmatprep.mubr.f32.mxu0 0.0
      %779 = vmatmul.mubr.f32.gmra.mrb[0].mxu0 %v368
      %v780 = vpop.f32.mrb[0].mxu0
      %v781 = vadd.f32 %v341, %v780
      %v782 = vpop.f32.mrb[0].mxu0
      %v783 = vadd.f32 %v341, %v782
      %784 = vmatprep.mubr.f32.mxu0 0.0
      %785 = vmatmul.mubr.f32.gmra.mrb[0].mxu0 %v371
      %v786 = vpop.f32.mrb[0].mxu0
      %v787 = vadd.f32 %v346, %v786
      %v788 = vpop.f32.mrb[0].mxu0
      %v789 = vadd.f32 %v346, %v788
      %790 = vdwg.mxu0
      %v791 = vmax.f32 %v632, 0.0
      %v792 = vmax.f32 %v634, 0.0
      %v793 = vmax.f32 %v745, 0.0
      %v794 = vmax.f32 %v747, 0.0
      %v795 = vmax.f32 %v638, 0.0
      %v796 = vmax.f32 %v640, 0.0
      %v797 = vmax.f32 %v751, 0.0
      %v798 = vmax.f32 %v753, 0.0
      %v799 = vmax.f32 %v644, 0.0
      %v800 = vmax.f32 %v646, 0.0
      %v801 = vmax.f32 %v757, 0.0
      %v802 = vmax.f32 %v759, 0.0
      %v803 = vmax.f32 %v650, 0.0
      %v804 = vmax.f32 %v652, 0.0
      %v805 = vmax.f32 %v763, 0.0
      %v806 = vmax.f32 %v765, 0.0
      %v807 = vmax.f32 %v656, 0.0
      %v808 = vmax.f32 %v658, 0.0
      %v809 = vmax.f32 %v769, 0.0
      %v810 = vmax.f32 %v771, 0.0
      %v811 = vmax.f32 %v662, 0.0
      %v812 = vmax.f32 %v664, 0.0
      %v813 = vmax.f32 %v775, 0.0
      %v814 = vmax.f32 %v777, 0.0
      %v815 = vmax.f32 %v668, 0.0
      %v816 = vmax.f32 %v670, 0.0
      %v817 = vmax.f32 %v781, 0.0
      %v818 = vmax.f32 %v783, 0.0
      %v819 = vmax.f32 %v674, 0.0
      %v820 = vmax.f32 %v676, 0.0
      %v821 = vmax.f32 %v787, 0.0
      %v822 = vmax.f32 %v789, 0.0
      %v823 = vld [vmem:[%s2] sm:$0xff]
      %v824 = vld [vmem:[%s2 + $0x8] sm:$0xff]
      %v825 = vld [vmem:[%s2 + $0x10] sm:$0xff]
      %v826 = vld [vmem:[%s2 + $0x18] sm:$0xff]
      %v827 = vld [vmem:[%s2 + $0x20] sm:$0xff]
      %v828 = vld [vmem:[%s2 + $0x28] sm:$0xff]
      %v829 = vld [vmem:[%s2 + $0x30] sm:$0xff]
      %v830 = vld [vmem:[%s2 + $0x38] sm:$0xff]
      %831 = vset.pattern.permute.xlu0 1
      %832 = vperm.xlu0 %831, %v292
      %v833 = vpop.permute.xlu0 %832
      %835 = vset.pattern.permute.xlu0 1
      %836 = vperm.xlu0 %835, %v293
      %v837 = vpop.permute.xlu0 %836
      %839 = vset.pattern.permute.xlu0 1
      %840 = vperm.xlu0 %839, %v294
      %v841 = vpop.permute.xlu0 %840
      %843 = vset.pattern.permute.xlu0 1
      %844 = vperm.xlu0 %843, %v295
      %v845 = vpop.permute.xlu0 %844
      %847 = vset.pattern.permute.xlu0 1
      %848 = vperm.xlu0 %847, %v296
      %v849 = vpop.permute.xlu0 %848
      %851 = vset.pattern.permute.xlu0 1
      %852 = vperm.xlu0 %851, %v297
      %v853 = vpop.permute.xlu0 %852
      %855 = vset.pattern.permute.xlu0 1
      %856 = vperm.xlu0 %855, %v298
      %v857 = vpop.permute.xlu0 %856
      %859 = vset.pattern.permute.xlu0 1
      %860 = vperm.xlu0 %859, %v299
      %v861 = vpop.permute.xlu0 %860
      %vm863 = vcmask 523264
      %v865 = vsel %vm863, %v823, 0
      %v868 = vsel %vm863, %v824, 0
      %v871 = vsel %vm863, %v825, 0
      %v874 = vsel %vm863, %v826, 0
      %v877 = vsel %vm863, %v827, 0
      %v880 = vsel %vm863, %v828, 0
      %v883 = vsel %vm863, %v829, 0
      %v886 = vsel %vm863, %v830, 0
      %888 = vmatprep.subr.mxu0 %v792
      %889 = vmatpush1.msra.mxu0 %v791
      %890 = vmatprep.subr.mxu0 %v796
      %891 = vmatpush1.msra.mxu0 %v795
      %892 = vmatprep.subr.mxu0 %v800
      %893 = vmatpush1.msra.mxu0 %v799
      %894 = vmatprep.subr.mxu0 %v804
      %895 = vmatpush1.msra.mxu0 %v803
      %896 = vmatprep.subr.mxu0 %v808
      %897 = vmatpush1.msra.mxu0 %v807
      %898 = vmatprep.subr.mxu0 %v812
      %899 = vmatpush1.msra.mxu0 %v811
      %900 = vmatprep.subr.mxu0 %v816
      %901 = vmatpush1.msra.mxu0 %v815
      %902 = vmatprep.subr.mxu0 %v820
      %903 = vmatpush1.msra.mxu0 %v819
      %904 = vmatprep.subr.mxu0 0.0
      %905 = vmatpush1.msra.mxu0 0.0
      %906 = vmatprep.subr.mxu0 0.0
      %907 = vmatpush1.msra.mxu0 0.0
      %908 = vmatprep.subr.mxu0 0.0
      %909 = vmatpush1.msra.mxu0 0.0
      %910 = vmatprep.subr.mxu0 0.0
      %911 = vmatpush1.msra.mxu0 0.0
      %912 = vmatprep.subr.mxu0 0.0
      %913 = vmatpush1.msra.mxu0 0.0
      %914 = vmatprep.subr.mxu0 0.0
      %915 = vmatpush1.msra.mxu0 0.0
      %916 = vmatprep.subr.mxu0 0.0
      %917 = vmatpush1.msra.mxu0 0.0
      %918 = vmatprep.subr.mxu0 0.0
      %919 = vmatpush1.msra.mxu0 0.0
      %920 = vmatprep.subr.mxu0 0.0
      %921 = vmatpush1.msra.mxu0 0.0
      %922 = vmatprep.subr.mxu0 0.0
      %923 = vmatpush1.msra.mxu0 0.0
      %924 = vmatprep.subr.mxu0 0.0
      %925 = vmatpush1.msra.mxu0 0.0
      %926 = vmatprep.subr.mxu0 0.0
      %927 = vmatpush1.msra.mxu0 0.0
      %928 = vmatprep.subr.mxu0 0.0
      %929 = vmatpush1.msra.mxu0 0.0
      %930 = vmatprep.subr.mxu0 0.0
      %931 = vmatpush1.msra.mxu0 0.0
      %932 = vmatprep.subr.mxu0 0.0
      %933 = vmatpush1.msra.mxu0 0.0
      %934 = vmatprep.subr.mxu0 0.0
      %935 = vmatpush1.msra.mxu0 0.0
      %936 = vmatprep.subr.mxu0 0.0
      %937 = vmatpush1.msra.mxu0 0.0
      %938 = vmatprep.subr.mxu0 0.0
      %939 = vmatpush1.msra.mxu0 0.0
      %940 = vmatprep.subr.mxu0 0.0
      %941 = vmatpush1.msra.mxu0 0.0
      %942 = vmatprep.subr.mxu0 0.0
      %943 = vmatpush1.msra.mxu0 0.0
      %944 = vmatprep.subr.mxu0 0.0
      %945 = vmatpush1.msra.mxu0 0.0
      %946 = vmatprep.subr.mxu0 0.0
      %947 = vmatpush1.msra.mxu0 0.0
      %948 = vmatprep.subr.mxu0 0.0
      %949 = vmatpush1.msra.mxu0 0.0
      %950 = vmatprep.subr.mxu0 0.0
      %951 = vmatpush1.msra.mxu0 0.0
      %952 = vmatprep.mubr.f32.mxu0 0.0
      %953 = vmatmul.mubr.f32.gmra.mrb[0].mxu0 %v865
      %v954 = vpop.f32.mrb[0].mxu0
      %v955 = vadd.f32 %v833, %v954
      %v956 = vpop.f32.mrb[0].mxu0
      %v957 = vadd.f32 %v833, %v956
      %958 = vmatprep.mubr.f32.mxu0 0.0
      %959 = vmatmul.mubr.f32.gmra.mrb[0].mxu0 %v868
      %v960 = vpop.f32.mrb[0].mxu0
      %v961 = vadd.f32 %v837, %v960
      %v962 = vpop.f32.mrb[0].mxu0
      %v963 = vadd.f32 %v837, %v962
      %964 = vmatprep.mubr.f32.mxu0 0.0
      %965 = vmatmul.mubr.f32.gmra.mrb[0].mxu0 %v871
      %v966 = vpop.f32.mrb[0].mxu0
      %v967 = vadd.f32 %v841, %v966
      %v968 = vpop.f32.mrb[0].mxu0
      %v969 = vadd.f32 %v841, %v968
      %970 = vmatprep.mubr.f32.mxu0 0.0
      %971 = vmatmul.mubr.f32.gmra.mrb[0].mxu0 %v874
      %v972 = vpop.f32.mrb[0].mxu0
      %v973 = vadd.f32 %v845, %v972
      %v974 = vpop.f32.mrb[0].mxu0
      %v975 = vadd.f32 %v845, %v974
      %976 = vmatprep.mubr.f32.mxu0 0.0
      %977 = vmatmul.mubr.f32.gmra.mrb[0].mxu0 %v877
      %v978 = vpop.f32.mrb[0].mxu0
      %v979 = vadd.f32 %v849, %v978
      %v980 = vpop.f32.mrb[0].mxu0
      %v981 = vadd.f32 %v849, %v980
      %982 = vmatprep.mubr.f32.mxu0 0.0
      %983 = vmatmul.mubr.f32.gmra.mrb[0].mxu0 %v880
      %v984 = vpop.f32.mrb[0].mxu0
      %v985 = vadd.f32 %v853, %v984
      %v986 = vpop.f32.mrb[0].mxu0
      %v987 = vadd.f32 %v853, %v986
      %988 = vmatprep.mubr.f32.mxu0 0.0
      %989 = vmatmul.mubr.f32.gmra.mrb[0].mxu0 %v883
      %v990 = vpop.f32.mrb[0].mxu0
      %v991 = vadd.f32 %v857, %v990
      %v992 = vpop.f32.mrb[0].mxu0
      %v993 = vadd.f32 %v857, %v992
      %994 = vmatprep.mubr.f32.mxu0 0.0
      %995 = vmatmul.mubr.f32.gmra.mrb[0].mxu0 %v886
      %v996 = vpop.f32.mrb[0].mxu0
      %v997 = vadd.f32 %v861, %v996
      %v998 = vpop.f32.mrb[0].mxu0
      %v999 = vadd.f32 %v861, %v998
      %1000 = vdwg.mxu0
      %1001 = vmatprep.subr.mxu0 %v794
      %1002 = vmatpush1.msra.mxu0 %v793
      %1003 = vmatprep.subr.mxu0 %v798
      %1004 = vmatpush1.msra.mxu0 %v797
      %1005 = vmatprep.subr.mxu0 %v802
      %1006 = vmatpush1.msra.mxu0 %v801
      %1007 = vmatprep.subr.mxu0 %v806
      %1008 = vmatpush1.msra.mxu0 %v805
      %1009 = vmatprep.subr.mxu0 %v810
      %1010 = vmatpush1.msra.mxu0 %v809
      %1011 = vmatprep.subr.mxu0 %v814
      %1012 = vmatpush1.msra.mxu0 %v813
      %1013 = vmatprep.subr.mxu0 %v818
      %1014 = vmatpush1.msra.mxu0 %v817
      %1015 = vmatprep.subr.mxu0 %v822
      %1016 = vmatpush1.msra.mxu0 %v821
      %1017 = vmatprep.subr.mxu0 0.0
      %1018 = vmatpush1.msra.mxu0 0.0
      %1019 = vmatprep.subr.mxu0 0.0
      %1020 = vmatpush1.msra.mxu0 0.0
      %1021 = vmatprep.subr.mxu0 0.0
      %1022 = vmatpush1.msra.mxu0 0.0
      %1023 = vmatprep.subr.mxu0 0.0
      %1024 = vmatpush1.msra.mxu0 0.0
      %1025 = vmatprep.subr.mxu0 0.0
      %1026 = vmatpush1.msra.mxu0 0.0
      %1027 = vmatprep.subr.mxu0 0.0
      %1028 = vmatpush1.msra.mxu0 0.0
      %1029 = vmatprep.subr.mxu0 0.0
      %1030 = vmatpush1.msra.mxu0 0.0
      %1031 = vmatprep.subr.mxu0 0.0
      %1032 = vmatpush1.msra.mxu0 0.0
      %1033 = vmatprep.subr.mxu0 0.0
      %1034 = vmatpush1.msra.mxu0 0.0
      %1035 = vmatprep.subr.mxu0 0.0
      %1036 = vmatpush1.msra.mxu0 0.0
      %1037 = vmatprep.subr.mxu0 0.0
      %1038 = vmatpush1.msra.mxu0 0.0
      %1039 = vmatprep.subr.mxu0 0.0
      %1040 = vmatpush1.msra.mxu0 0.0
      %1041 = vmatprep.subr.mxu0 0.0
      %1042 = vmatpush1.msra.mxu0 0.0
      %1043 = vmatprep.subr.mxu0 0.0
      %1044 = vmatpush1.msra.mxu0 0.0
      %1045 = vmatprep.subr.mxu0 0.0
      %1046 = vmatpush1.msra.mxu0 0.0
      %1047 = vmatprep.subr.mxu0 0.0
      %1048 = vmatpush1.msra.mxu0 0.0
      %1049 = vmatprep.subr.mxu0 0.0
      %1050 = vmatpush1.msra.mxu0 0.0
      %1051 = vmatprep.subr.mxu0 0.0
      %1052 = vmatpush1.msra.mxu0 0.0
      %1053 = vmatprep.subr.mxu0 0.0
      %1054 = vmatpush1.msra.mxu0 0.0
      %1055 = vmatprep.subr.mxu0 0.0
      %1056 = vmatpush1.msra.mxu0 0.0
      %1057 = vmatprep.subr.mxu0 0.0
      %1058 = vmatpush1.msra.mxu0 0.0
      %1059 = vmatprep.subr.mxu0 0.0
      %1060 = vmatpush1.msra.mxu0 0.0
      %1061 = vmatprep.subr.mxu0 0.0
      %1062 = vmatpush1.msra.mxu0 0.0
      %1063 = vmatprep.subr.mxu0 0.0
      %1064 = vmatpush1.msra.mxu0 0.0
      %1065 = vmatprep.mubr.f32.mxu0 0.0
      %1066 = vmatmul.mubr.f32.gmra.mrb[0].mxu0 %v865
      %v1067 = vpop.f32.mrb[0].mxu0
      %v1068 = vadd.f32 %v833, %v1067
      %v1069 = vpop.f32.mrb[0].mxu0
      %v1070 = vadd.f32 %v833, %v1069
      %1071 = vmatprep.mubr.f32.mxu0 0.0
      %1072 = vmatmul.mubr.f32.gmra.mrb[0].mxu0 %v868
      %v1073 = vpop.f32.mrb[0].mxu0
      %v1074 = vadd.f32 %v837, %v1073
      %v1075 = vpop.f32.mrb[0].mxu0
      %v1076 = vadd.f32 %v837, %v1075
      %1077 = vmatprep.mubr.f32.mxu0 0.0
      %1078 = vmatmul.mubr.f32.gmra.mrb[0].mxu0 %v871
      %v1079 = vpop.f32.mrb[0].mxu0
      %v1080 = vadd.f32 %v841, %v1079
      %v1081 = vpop.f32.mrb[0].mxu0
      %v1082 = vadd.f32 %v841, %v1081
      %1083 = vmatprep.mubr.f32.mxu0 0.0
      %1084 = vmatmul.mubr.f32.gmra.mrb[0].mxu0 %v874
      %v1085 = vpop.f32.mrb[0].mxu0
      %v1086 = vadd.f32 %v845, %v1085
      %v1087 = vpop.f32.mrb[0].mxu0
      %v1088 = vadd.f32 %v845, %v1087
      %1089 = vmatprep.mubr.f32.mxu0 0.0
      %1090 = vmatmul.mubr.f32.gmra.mrb[0].mxu0 %v877
      %v1091 = vpop.f32.mrb[0].mxu0
      %v1092 = vadd.f32 %v849, %v1091
      %v1093 = vpop.f32.mrb[0].mxu0
      %v1094 = vadd.f32 %v849, %v1093
      %1095 = vmatprep.mubr.f32.mxu0 0.0
      %1096 = vmatmul.mubr.f32.gmra.mrb[0].mxu0 %v880
      %v1097 = vpop.f32.mrb[0].mxu0
      %v1098 = vadd.f32 %v853, %v1097
      %v1099 = vpop.f32.mrb[0].mxu0
      %v1100 = vadd.f32 %v853, %v1099
      %1101 = vmatprep.mubr.f32.mxu0 0.0
      %1102 = vmatmul.mubr.f32.gmra.mrb[0].mxu0 %v883
      %v1103 = vpop.f32.mrb[0].mxu0
      %v1104 = vadd.f32 %v857, %v1103
      %v1105 = vpop.f32.mrb[0].mxu0
      %v1106 = vadd.f32 %v857, %v1105
      %1107 = vmatprep.mubr.f32.mxu0 0.0
      %1108 = vmatmul.mubr.f32.gmra.mrb[0].mxu0 %v886
      %v1109 = vpop.f32.mrb[0].mxu0
      %v1110 = vadd.f32 %v861, %v1109
      %v1111 = vpop.f32.mrb[0].mxu0
      %v1112 = vadd.f32 %v861, %v1111
      %1113 = vdwg.mxu0
      %v1114 = vmax.f32 %v955, 0.0
      %v1115 = vmax.f32 %v957, 0.0
      %v1116 = vmax.f32 %v1068, 0.0
      %v1117 = vmax.f32 %v1070, 0.0
      %v1118 = vmax.f32 %v961, 0.0
      %v1119 = vmax.f32 %v963, 0.0
      %v1120 = vmax.f32 %v1074, 0.0
      %v1121 = vmax.f32 %v1076, 0.0
      %v1122 = vmax.f32 %v967, 0.0
      %v1123 = vmax.f32 %v969, 0.0
      %v1124 = vmax.f32 %v1080, 0.0
      %v1125 = vmax.f32 %v1082, 0.0
      %v1126 = vmax.f32 %v973, 0.0
      %v1127 = vmax.f32 %v975, 0.0
      %v1128 = vmax.f32 %v1086, 0.0
      %v1129 = vmax.f32 %v1088, 0.0
      %v1130 = vmax.f32 %v979, 0.0
      %v1131 = vmax.f32 %v981, 0.0
      %v1132 = vmax.f32 %v1092, 0.0
      %v1133 = vmax.f32 %v1094, 0.0
      %v1134 = vmax.f32 %v985, 0.0
      %v1135 = vmax.f32 %v987, 0.0
      %v1136 = vmax.f32 %v1098, 0.0
      %v1137 = vmax.f32 %v1100, 0.0
      %v1138 = vmax.f32 %v991, 0.0
      %v1139 = vmax.f32 %v993, 0.0
      %v1140 = vmax.f32 %v1104, 0.0
      %v1141 = vmax.f32 %v1106, 0.0
      %v1142 = vmax.f32 %v997, 0.0
      %v1143 = vmax.f32 %v999, 0.0
      %v1144 = vmax.f32 %v1110, 0.0
      %v1145 = vmax.f32 %v1112, 0.0
      %v1146 = vld [vmem:[%s3] sm:$0x1f]
      %1147 = vxpose.xlu0.b32.start [1/16] %v1114, 128
      %1148 = vxpose.xlu0.b32.cont [2/16] %v1118, 128
      %1149 = vxpose.xlu0.b32.cont [3/16] %v1122, 128
      %1150 = vxpose.xlu0.b32.cont [4/16] %v1126, 128
      %1151 = vxpose.xlu0.b32.cont [5/16] %v1130, 128
      %1152 = vxpose.xlu0.b32.cont [6/16] %v1134, 128
      %1153 = vxpose.xlu0.b32.cont [7/16] %v1138, 128
      %1154 = vxpose.xlu0.b32.cont [8/16] %v1142, 128
      %1155 = vxpose.xlu0.b32.cont [9/16] 0.0, 128
      %1156 = vxpose.xlu0.b32.cont [10/16] 0.0, 128
      %1157 = vxpose.xlu0.b32.cont [11/16] 0.0, 128
      %1158 = vxpose.xlu0.b32.cont [12/16] 0.0, 128
      %1159 = vxpose.xlu0.b32.cont [13/16] 0.0, 128
      %1160 = vxpose.xlu0.b32.cont [14/16] 0.0, 128
      %1161 = vxpose.xlu0.b32.cont [15/16] 0.0, 128
      %1162 = vxpose.xlu0.b32.end [16/16] 0.0, 128
      %v1163 = vpop.trf.xlu0
      %v1164 = vpop.trf.xlu0
      %v1165 = vpop.trf.xlu0
      %v1166 = vpop.trf.xlu0
      %v1167 = vpop.trf.xlu0
      %v1168 = vpop.trf.xlu0
      %v1169 = vpop.trf.xlu0
      %v1170 = vpop.trf.xlu0
      %v1171 = vpop.trf.xlu0
      %v1172 = vpop.trf.xlu0
      %v1173 = vpop.trf.xlu0
      %v1174 = vpop.trf.xlu0
      %v1175 = vpop.trf.xlu0
      %v1176 = vpop.trf.xlu0
      %v1177 = vpop.trf.xlu0
      %v1178 = vpop.trf.xlu0
      %1179 = vxpose.xlu0.b32.start [1/16] %v1115, 128
      %1180 = vxpose.xlu0.b32.cont [2/16] %v1119, 128
      %1181 = vxpose.xlu0.b32.cont [3/16] %v1123, 128
      %1182 = vxpose.xlu0.b32.cont [4/16] %v1127, 128
      %1183 = vxpose.xlu0.b32.cont [5/16] %v1131, 128
      %1184 = vxpose.xlu0.b32.cont [6/16] %v1135, 128
      %1185 = vxpose.xlu0.b32.cont [7/16] %v1139, 128
      %1186 = vxpose.xlu0.b32.cont [8/16] %v1143, 128
      %1187 = vxpose.xlu0.b32.cont [9/16] 0.0, 128
      %1188 = vxpose.xlu0.b32.cont [10/16] 0.0, 128
      %1189 = vxpose.xlu0.b32.cont [11/16] 0.0, 128
      %1190 = vxpose.xlu0.b32.cont [12/16] 0.0, 128
      %1191 = vxpose.xlu0.b32.cont [13/16] 0.0, 128
      %1192 = vxpose.xlu0.b32.cont [14/16] 0.0, 128
      %1193 = vxpose.xlu0.b32.cont [15/16] 0.0, 128
      %1194 = vxpose.xlu0.b32.end [16/16] 0.0, 128
      %v1195 = vpop.trf.xlu0
      %v1196 = vpop.trf.xlu0
      %v1197 = vpop.trf.xlu0
      %v1198 = vpop.trf.xlu0
      %v1199 = vpop.trf.xlu0
      %v1200 = vpop.trf.xlu0
      %v1201 = vpop.trf.xlu0
      %v1202 = vpop.trf.xlu0
      %v1203 = vpop.trf.xlu0
      %v1204 = vpop.trf.xlu0
      %v1205 = vpop.trf.xlu0
      %v1206 = vpop.trf.xlu0
      %v1207 = vpop.trf.xlu0
      %v1208 = vpop.trf.xlu0
      %v1209 = vpop.trf.xlu0
      %v1210 = vpop.trf.xlu0
      %1211 = vxpose.xlu0.b32.start [1/16] %v1116, 128
      %1212 = vxpose.xlu0.b32.cont [2/16] %v1120, 128
      %1213 = vxpose.xlu0.b32.cont [3/16] %v1124, 128
      %1214 = vxpose.xlu0.b32.cont [4/16] %v1128, 128
      %1215 = vxpose.xlu0.b32.cont [5/16] %v1132, 128
      %1216 = vxpose.xlu0.b32.cont [6/16] %v1136, 128
      %1217 = vxpose.xlu0.b32.cont [7/16] %v1140, 128
      %1218 = vxpose.xlu0.b32.cont [8/16] %v1144, 128
      %1219 = vxpose.xlu0.b32.cont [9/16] 0.0, 128
      %1220 = vxpose.xlu0.b32.cont [10/16] 0.0, 128
      %1221 = vxpose.xlu0.b32.cont [11/16] 0.0, 128
      %1222 = vxpose.xlu0.b32.cont [12/16] 0.0, 128
      %1223 = vxpose.xlu0.b32.cont [13/16] 0.0, 128
      %1224 = vxpose.xlu0.b32.cont [14/16] 0.0, 128
      %1225 = vxpose.xlu0.b32.cont [15/16] 0.0, 128
      %1226 = vxpose.xlu0.b32.end [16/16] 0.0, 128
      %v1227 = vpop.trf.xlu0
      %v1228 = vpop.trf.xlu0
      %v1229 = vpop.trf.xlu0
      %v1230 = vpop.trf.xlu0
      %v1231 = vpop.trf.xlu0
      %v1232 = vpop.trf.xlu0
      %v1233 = vpop.trf.xlu0
      %v1234 = vpop.trf.xlu0
      %v1235 = vpop.trf.xlu0
      %v1236 = vpop.trf.xlu0
      %v1237 = vpop.trf.xlu0
      %v1238 = vpop.trf.xlu0
      %v1239 = vpop.trf.xlu0
      %v1240 = vpop.trf.xlu0
      %v1241 = vpop.trf.xlu0
      %v1242 = vpop.trf.xlu0
      %1243 = vxpose.xlu0.b32.start [1/16] %v1117, 128
      %1244 = vxpose.xlu0.b32.cont [2/16] %v1121, 128
      %1245 = vxpose.xlu0.b32.cont [3/16] %v1125, 128
      %1246 = vxpose.xlu0.b32.cont [4/16] %v1129, 128
      %1247 = vxpose.xlu0.b32.cont [5/16] %v1133, 128
      %1248 = vxpose.xlu0.b32.cont [6/16] %v1137, 128
      %1249 = vxpose.xlu0.b32.cont [7/16] %v1141, 128
      %1250 = vxpose.xlu0.b32.cont [8/16] %v1145, 128
      %1251 = vxpose.xlu0.b32.cont [9/16] 0.0, 128
      %1252 = vxpose.xlu0.b32.cont [10/16] 0.0, 128
      %1253 = vxpose.xlu0.b32.cont [11/16] 0.0, 128
      %1254 = vxpose.xlu0.b32.cont [12/16] 0.0, 128
      %1255 = vxpose.xlu0.b32.cont [13/16] 0.0, 128
      %1256 = vxpose.xlu0.b32.cont [14/16] 0.0, 128
      %1257 = vxpose.xlu0.b32.cont [15/16] 0.0, 128
      %1258 = vxpose.xlu0.b32.end [16/16] 0.0, 128
      %v1259 = vpop.trf.xlu0
      %v1260 = vpop.trf.xlu0
      %v1261 = vpop.trf.xlu0
      %v1262 = vpop.trf.xlu0
      %v1263 = vpop.trf.xlu0
      %v1264 = vpop.trf.xlu0
      %v1265 = vpop.trf.xlu0
      %v1266 = vpop.trf.xlu0
      %v1267 = vpop.trf.xlu0
      %v1268 = vpop.trf.xlu0
      %v1269 = vpop.trf.xlu0
      %v1270 = vpop.trf.xlu0
      %v1271 = vpop.trf.xlu0
      %v1272 = vpop.trf.xlu0
      %v1273 = vpop.trf.xlu0
      %v1274 = vpop.trf.xlu0
      %1275 = vset.pattern.permute.xlu0 2
      %1276 = vperm.xlu0 %1275, %v292
      %v1277 = vpop.permute.xlu0 %1276
      %v1278 = vlaneseq
      %v1279 = vand.u32 %v1278, 127
      %v1280 = vlaneseq
      %v1281 = vshrl.u32 %v1280, 7
      %v1282 = vsub.s32 %v1279, %v1281
      %v1283 = vrot.slane %v1277, %v1282
      %vm1284 = vcmask 1042434
      %v1285 = vsel %vm1284, %v1283, %v1283
      %vm1286 = vcmask 1043459
      %v1287 = vsel %vm1286, %v1283, %v1285
      %vm1288 = vcmask 1044484
      %v1289 = vsel %vm1288, %v1283, %v1287
      %vm1290 = vcmask 1045509
      %v1291 = vsel %vm1290, %v1283, %v1289
      %vm1292 = vcmask 1046534
      %v1293 = vsel %vm1292, %v1283, %v1291
      %vm1294 = vcmask 1047559
      %v1295 = vsel %vm1294, %v1283, %v1293
      %v1298 = vsel %vm863, %v1163, 0
      %v1301 = vsel %vm863, %v1164, 0
      %v1304 = vsel %vm863, %v1165, 0
      %v1307 = vsel %vm863, %v1166, 0
      %v1310 = vsel %vm863, %v1167, 0
      %v1313 = vsel %vm863, %v1168, 0
      %v1316 = vsel %vm863, %v1169, 0
      %v1319 = vsel %vm863, %v1170, 0
      %v1322 = vsel %vm863, %v1171, 0
      %v1325 = vsel %vm863, %v1172, 0
      %v1328 = vsel %vm863, %v1173, 0
      %v1331 = vsel %vm863, %v1174, 0
      %v1334 = vsel %vm863, %v1175, 0
      %v1337 = vsel %vm863, %v1176, 0
      %v1340 = vsel %vm863, %v1177, 0
      %v1343 = vsel %vm863, %v1178, 0
      %v1346 = vsel %vm863, %v1195, 0
      %v1349 = vsel %vm863, %v1196, 0
      %v1352 = vsel %vm863, %v1197, 0
      %v1355 = vsel %vm863, %v1198, 0
      %v1358 = vsel %vm863, %v1199, 0
      %v1361 = vsel %vm863, %v1200, 0
      %v1364 = vsel %vm863, %v1201, 0
      %v1367 = vsel %vm863, %v1202, 0
      %v1370 = vsel %vm863, %v1203, 0
      %v1373 = vsel %vm863, %v1204, 0
      %v1376 = vsel %vm863, %v1205, 0
      %v1379 = vsel %vm863, %v1206, 0
      %v1382 = vsel %vm863, %v1207, 0
      %v1385 = vsel %vm863, %v1208, 0
      %v1388 = vsel %vm863, %v1209, 0
      %v1391 = vsel %vm863, %v1210, 0
      %v1394 = vsel %vm863, %v1227, 0
      %v1397 = vsel %vm863, %v1228, 0
      %v1400 = vsel %vm863, %v1229, 0
      %v1403 = vsel %vm863, %v1230, 0
      %v1406 = vsel %vm863, %v1231, 0
      %v1409 = vsel %vm863, %v1232, 0
      %v1412 = vsel %vm863, %v1233, 0
      %v1415 = vsel %vm863, %v1234, 0
      %v1418 = vsel %vm863, %v1235, 0
      %v1421 = vsel %vm863, %v1236, 0
      %v1424 = vsel %vm863, %v1237, 0
      %v1427 = vsel %vm863, %v1238, 0
      %v1430 = vsel %vm863, %v1239, 0
      %v1433 = vsel %vm863, %v1240, 0
      %v1436 = vsel %vm863, %v1241, 0
      %v1439 = vsel %vm863, %v1242, 0
      %v1442 = vsel %vm863, %v1259, 0
      %v1445 = vsel %vm863, %v1260, 0
      %v1448 = vsel %vm863, %v1261, 0
      %v1451 = vsel %vm863, %v1262, 0
      %v1454 = vsel %vm863, %v1263, 0
      %v1457 = vsel %vm863, %v1264, 0
      %v1460 = vsel %vm863, %v1265, 0
      %v1463 = vsel %vm863, %v1266, 0
      %v1466 = vsel %vm863, %v1267, 0
      %v1469 = vsel %vm863, %v1268, 0
      %v1472 = vsel %vm863, %v1269, 0
      %v1475 = vsel %vm863, %v1270, 0
      %v1478 = vsel %vm863, %v1271, 0
      %v1481 = vsel %vm863, %v1272, 0
      %v1484 = vsel %vm863, %v1273, 0
      %v1487 = vsel %vm863, %v1274, 0
      %v1490 = vsel %vm863, %v1146, 0
      %1492 = vmatprep.subr.mxu0 0.0
      %1493 = vmatpush1.xpose.msra.mxu0 %v1490
      %1494 = vmatprep.subr.mxu0 0.0
      %1495 = vmatpush1.xpose.msra.mxu0 0.0
      %1496 = vmatprep.subr.mxu0 0.0
      %1497 = vmatpush1.xpose.msra.mxu0 0.0
      %1498 = vmatprep.subr.mxu0 0.0
      %1499 = vmatpush1.xpose.msra.mxu0 0.0
      %1500 = vmatprep.subr.mxu0 0.0
      %1501 = vmatpush1.xpose.msra.mxu0 0.0
      %1502 = vmatprep.subr.mxu0 0.0
      %1503 = vmatpush1.xpose.msra.mxu0 0.0
      %1504 = vmatprep.subr.mxu0 0.0
      %1505 = vmatpush1.xpose.msra.mxu0 0.0
      %1506 = vmatprep.subr.mxu0 0.0
      %1507 = vmatpush1.xpose.msra.mxu0 0.0
      %1508 = vmatprep.subr.mxu0 0.0
      %1509 = vmatpush1.xpose.msra.mxu0 0.0
      %1510 = vmatprep.subr.mxu0 0.0
      %1511 = vmatpush1.xpose.msra.mxu0 0.0
      %1512 = vmatprep.subr.mxu0 0.0
      %1513 = vmatpush1.xpose.msra.mxu0 0.0
      %1514 = vmatprep.subr.mxu0 0.0
      %1515 = vmatpush1.xpose.msra.mxu0 0.0
      %1516 = vmatprep.subr.mxu0 0.0
      %1517 = vmatpush1.xpose.msra.mxu0 0.0
      %1518 = vmatprep.subr.mxu0 0.0
      %1519 = vmatpush1.xpose.msra.mxu0 0.0
      %1520 = vmatprep.subr.mxu0 0.0
      %1521 = vmatpush1.xpose.msra.mxu0 0.0
      %1522 = vmatprep.subr.mxu0 0.0
      %1523 = vmatpush1.xpose.msra.mxu0 0.0
      %1524 = vmatprep.subr.mxu0 0.0
      %1525 = vmatpush1.xpose.msra.mxu0 0.0
      %1526 = vmatprep.subr.mxu0 0.0
      %1527 = vmatpush1.xpose.msra.mxu0 0.0
      %1528 = vmatprep.subr.mxu0 0.0
      %1529 = vmatpush1.xpose.msra.mxu0 0.0
      %1530 = vmatprep.subr.mxu0 0.0
      %1531 = vmatpush1.xpose.msra.mxu0 0.0
      %1532 = vmatprep.subr.mxu0 0.0
      %1533 = vmatpush1.xpose.msra.mxu0 0.0
      %1534 = vmatprep.subr.mxu0 0.0
      %1535 = vmatpush1.xpose.msra.mxu0 0.0
      %1536 = vmatprep.subr.mxu0 0.0
      %1537 = vmatpush1.xpose.msra.mxu0 0.0
      %1538 = vmatprep.subr.mxu0 0.0
      %1539 = vmatpush1.xpose.msra.mxu0 0.0
      %1540 = vmatprep.subr.mxu0 0.0
      %1541 = vmatpush1.xpose.msra.mxu0 0.0
      %1542 = vmatprep.subr.mxu0 0.0
      %1543 = vmatpush1.xpose.msra.mxu0 0.0
      %1544 = vmatprep.subr.mxu0 0.0
      %1545 = vmatpush1.xpose.msra.mxu0 0.0
      %1546 = vmatprep.subr.mxu0 0.0
      %1547 = vmatpush1.xpose.msra.mxu0 0.0
      %1548 = vmatprep.subr.mxu0 0.0
      %1549 = vmatpush1.xpose.msra.mxu0 0.0
      %1550 = vmatprep.subr.mxu0 0.0
      %1551 = vmatpush1.xpose.msra.mxu0 0.0
      %1552 = vmatprep.subr.mxu0 0.0
      %1553 = vmatpush1.xpose.msra.mxu0 0.0
      %1554 = vmatprep.subr.mxu0 0.0
      %1555 = vmatpush1.xpose.msra.mxu0 0.0
      %1556 = vmatprep.mubr.f32.mxu0 0.0
      %1557 = vmatmul.mubr.f32.gmra.mrb[0].mxu0 %v1298
      %v1558 = vpop.f32.mrb[0].mxu0
      %v1559 = vadd.f32 %v1295, %v1558
      %v1560 = vpop.f32.mrb[0].mxu0
      %1561 = vmatprep.mubr.f32.mxu0 0.0
      %1562 = vmatmul.mubr.f32.gmra.mrb[0].mxu0 %v1301
      %v1563 = vpop.f32.mrb[0].mxu0
      %v1564 = vadd.f32 %v1295, %v1563
      %v1565 = vpop.f32.mrb[0].mxu0
      %1566 = vmatprep.mubr.f32.mxu0 0.0
      %1567 = vmatmul.mubr.f32.gmra.mrb[0].mxu0 %v1304
      %v1568 = vpop.f32.mrb[0].mxu0
      %v1569 = vadd.f32 %v1295, %v1568
      %v1570 = vpop.f32.mrb[0].mxu0
      %1571 = vmatprep.mubr.f32.mxu0 0.0
      %1572 = vmatmul.mubr.f32.gmra.mrb[0].mxu0 %v1307
      %v1573 = vpop.f32.mrb[0].mxu0
      %v1574 = vadd.f32 %v1295, %v1573
      %v1575 = vpop.f32.mrb[0].mxu0
      %1576 = vmatprep.mubr.f32.mxu0 0.0
      %1577 = vmatmul.mubr.f32.gmra.mrb[0].mxu0 %v1310
      %v1578 = vpop.f32.mrb[0].mxu0
      %v1579 = vadd.f32 %v1295, %v1578
      %v1580 = vpop.f32.mrb[0].mxu0
      %1581 = vmatprep.mubr.f32.mxu0 0.0
      %1582 = vmatmul.mubr.f32.gmra.mrb[0].mxu0 %v1313
      %v1583 = vpop.f32.mrb[0].mxu0
      %v1584 = vadd.f32 %v1295, %v1583
      %v1585 = vpop.f32.mrb[0].mxu0
      %1586 = vmatprep.mubr.f32.mxu0 0.0
      %1587 = vmatmul.mubr.f32.gmra.mrb[0].mxu0 %v1316
      %v1588 = vpop.f32.mrb[0].mxu0
      %v1589 = vadd.f32 %v1295, %v1588
      %v1590 = vpop.f32.mrb[0].mxu0
      %1591 = vmatprep.mubr.f32.mxu0 0.0
      %1592 = vmatmul.mubr.f32.gmra.mrb[0].mxu0 %v1319
      %v1593 = vpop.f32.mrb[0].mxu0
      %v1594 = vadd.f32 %v1295, %v1593
      %v1595 = vpop.f32.mrb[0].mxu0
      %1596 = vmatprep.mubr.f32.mxu0 0.0
      %1597 = vmatmul.mubr.f32.gmra.mrb[0].mxu0 %v1322
      %v1598 = vpop.f32.mrb[0].mxu0
      %v1599 = vadd.f32 %v1295, %v1598
      %v1600 = vpop.f32.mrb[0].mxu0
      %1601 = vmatprep.mubr.f32.mxu0 0.0
      %1602 = vmatmul.mubr.f32.gmra.mrb[0].mxu0 %v1325
      %v1603 = vpop.f32.mrb[0].mxu0
      %v1604 = vadd.f32 %v1295, %v1603
      %v1605 = vpop.f32.mrb[0].mxu0
      %1606 = vmatprep.mubr.f32.mxu0 0.0
      %1607 = vmatmul.mubr.f32.gmra.mrb[0].mxu0 %v1328
      %v1608 = vpop.f32.mrb[0].mxu0
      %v1609 = vadd.f32 %v1295, %v1608
      %v1610 = vpop.f32.mrb[0].mxu0
      %1611 = vmatprep.mubr.f32.mxu0 0.0
      %1612 = vmatmul.mubr.f32.gmra.mrb[0].mxu0 %v1331
      %v1613 = vpop.f32.mrb[0].mxu0
      %v1614 = vadd.f32 %v1295, %v1613
      %v1615 = vpop.f32.mrb[0].mxu0
      %1616 = vmatprep.mubr.f32.mxu0 0.0
      %1617 = vmatmul.mubr.f32.gmra.mrb[0].mxu0 %v1334
      %v1618 = vpop.f32.mrb[0].mxu0
      %v1619 = vadd.f32 %v1295, %v1618
      %v1620 = vpop.f32.mrb[0].mxu0
      %1621 = vmatprep.mubr.f32.mxu0 0.0
      %1622 = vmatmul.mubr.f32.gmra.mrb[0].mxu0 %v1337
      %v1623 = vpop.f32.mrb[0].mxu0
      %v1624 = vadd.f32 %v1295, %v1623
      %v1625 = vpop.f32.mrb[0].mxu0
      %1626 = vmatprep.mubr.f32.mxu0 0.0
      %1627 = vmatmul.mubr.f32.gmra.mrb[0].mxu0 %v1340
      %v1628 = vpop.f32.mrb[0].mxu0
      %v1629 = vadd.f32 %v1295, %v1628
      %v1630 = vpop.f32.mrb[0].mxu0
      %1631 = vmatprep.mubr.f32.mxu0 0.0
      %1632 = vmatmul.mubr.f32.gmra.mrb[0].mxu0 %v1343
      %v1633 = vpop.f32.mrb[0].mxu0
      %v1634 = vadd.f32 %v1295, %v1633
      %v1635 = vpop.f32.mrb[0].mxu0
      %1636 = vmatprep.mubr.f32.mxu0 0.0
      %1637 = vmatmul.mubr.f32.gmra.mrb[0].mxu0 %v1346
      %v1638 = vpop.f32.mrb[0].mxu0
      %v1639 = vadd.f32 %v1295, %v1638
      %v1640 = vpop.f32.mrb[0].mxu0
      %1641 = vmatprep.mubr.f32.mxu0 0.0
      %1642 = vmatmul.mubr.f32.gmra.mrb[0].mxu0 %v1349
      %v1643 = vpop.f32.mrb[0].mxu0
      %v1644 = vadd.f32 %v1295, %v1643
      %v1645 = vpop.f32.mrb[0].mxu0
      %1646 = vmatprep.mubr.f32.mxu0 0.0
      %1647 = vmatmul.mubr.f32.gmra.mrb[0].mxu0 %v1352
      %v1648 = vpop.f32.mrb[0].mxu0
      %v1649 = vadd.f32 %v1295, %v1648
      %v1650 = vpop.f32.mrb[0].mxu0
      %1651 = vmatprep.mubr.f32.mxu0 0.0
      %1652 = vmatmul.mubr.f32.gmra.mrb[0].mxu0 %v1355
      %v1653 = vpop.f32.mrb[0].mxu0
      %v1654 = vadd.f32 %v1295, %v1653
      %v1655 = vpop.f32.mrb[0].mxu0
      %1656 = vmatprep.mubr.f32.mxu0 0.0
      %1657 = vmatmul.mubr.f32.gmra.mrb[0].mxu0 %v1358
      %v1658 = vpop.f32.mrb[0].mxu0
      %v1659 = vadd.f32 %v1295, %v1658
      %v1660 = vpop.f32.mrb[0].mxu0
      %1661 = vmatprep.mubr.f32.mxu0 0.0
      %1662 = vmatmul.mubr.f32.gmra.mrb[0].mxu0 %v1361
      %v1663 = vpop.f32.mrb[0].mxu0
      %v1664 = vadd.f32 %v1295, %v1663
      %v1665 = vpop.f32.mrb[0].mxu0
      %1666 = vmatprep.mubr.f32.mxu0 0.0
      %1667 = vmatmul.mubr.f32.gmra.mrb[0].mxu0 %v1364
      %v1668 = vpop.f32.mrb[0].mxu0
      %v1669 = vadd.f32 %v1295, %v1668
      %v1670 = vpop.f32.mrb[0].mxu0
      %1671 = vmatprep.mubr.f32.mxu0 0.0
      %1672 = vmatmul.mubr.f32.gmra.mrb[0].mxu0 %v1367
      %v1673 = vpop.f32.mrb[0].mxu0
      %v1674 = vadd.f32 %v1295, %v1673
      %v1675 = vpop.f32.mrb[0].mxu0
      %1676 = vmatprep.mubr.f32.mxu0 0.0
      %1677 = vmatmul.mubr.f32.gmra.mrb[0].mxu0 %v1370
      %v1678 = vpop.f32.mrb[0].mxu0
      %v1679 = vadd.f32 %v1295, %v1678
      %v1680 = vpop.f32.mrb[0].mxu0
      %1681 = vmatprep.mubr.f32.mxu0 0.0
      %1682 = vmatmul.mubr.f32.gmra.mrb[0].mxu0 %v1373
      %v1683 = vpop.f32.mrb[0].mxu0
      %v1684 = vadd.f32 %v1295, %v1683
      %v1685 = vpop.f32.mrb[0].mxu0
      %1686 = vmatprep.mubr.f32.mxu0 0.0
      %1687 = vmatmul.mubr.f32.gmra.mrb[0].mxu0 %v1376
      %v1688 = vpop.f32.mrb[0].mxu0
      %v1689 = vadd.f32 %v1295, %v1688
      %v1690 = vpop.f32.mrb[0].mxu0
      %1691 = vmatprep.mubr.f32.mxu0 0.0
      %1692 = vmatmul.mubr.f32.gmra.mrb[0].mxu0 %v1379
      %v1693 = vpop.f32.mrb[0].mxu0
      %v1694 = vadd.f32 %v1295, %v1693
      %v1695 = vpop.f32.mrb[0].mxu0
      %1696 = vmatprep.mubr.f32.mxu0 0.0
      %1697 = vmatmul.mubr.f32.gmra.mrb[0].mxu0 %v1382
      %v1698 = vpop.f32.mrb[0].mxu0
      %v1699 = vadd.f32 %v1295, %v1698
      %v1700 = vpop.f32.mrb[0].mxu0
      %1701 = vmatprep.mubr.f32.mxu0 0.0
      %1702 = vmatmul.mubr.f32.gmra.mrb[0].mxu0 %v1385
      %v1703 = vpop.f32.mrb[0].mxu0
      %v1704 = vadd.f32 %v1295, %v1703
      %v1705 = vpop.f32.mrb[0].mxu0
      %1706 = vmatprep.mubr.f32.mxu0 0.0
      %1707 = vmatmul.mubr.f32.gmra.mrb[0].mxu0 %v1388
      %v1708 = vpop.f32.mrb[0].mxu0
      %v1709 = vadd.f32 %v1295, %v1708
      %v1710 = vpop.f32.mrb[0].mxu0
      %1711 = vmatprep.mubr.f32.mxu0 0.0
      %1712 = vmatmul.mubr.f32.gmra.mrb[0].mxu0 %v1391
      %v1713 = vpop.f32.mrb[0].mxu0
      %v1714 = vadd.f32 %v1295, %v1713
      %v1715 = vpop.f32.mrb[0].mxu0
      %1716 = vmatprep.mubr.f32.mxu0 0.0
      %1717 = vmatmul.mubr.f32.gmra.mrb[0].mxu0 %v1394
      %v1718 = vpop.f32.mrb[0].mxu0
      %v1719 = vadd.f32 %v1295, %v1718
      %v1720 = vpop.f32.mrb[0].mxu0
      %1721 = vmatprep.mubr.f32.mxu0 0.0
      %1722 = vmatmul.mubr.f32.gmra.mrb[0].mxu0 %v1397
      %v1723 = vpop.f32.mrb[0].mxu0
      %v1724 = vadd.f32 %v1295, %v1723
      %v1725 = vpop.f32.mrb[0].mxu0
      %1726 = vmatprep.mubr.f32.mxu0 0.0
      %1727 = vmatmul.mubr.f32.gmra.mrb[0].mxu0 %v1400
      %v1728 = vpop.f32.mrb[0].mxu0
      %v1729 = vadd.f32 %v1295, %v1728
      %v1730 = vpop.f32.mrb[0].mxu0
      %1731 = vmatprep.mubr.f32.mxu0 0.0
      %1732 = vmatmul.mubr.f32.gmra.mrb[0].mxu0 %v1403
      %v1733 = vpop.f32.mrb[0].mxu0
      %v1734 = vadd.f32 %v1295, %v1733
      %v1735 = vpop.f32.mrb[0].mxu0
      %1736 = vmatprep.mubr.f32.mxu0 0.0
      %1737 = vmatmul.mubr.f32.gmra.mrb[0].mxu0 %v1406
      %v1738 = vpop.f32.mrb[0].mxu0
      %v1739 = vadd.f32 %v1295, %v1738
      %v1740 = vpop.f32.mrb[0].mxu0
      %1741 = vmatprep.mubr.f32.mxu0 0.0
      %1742 = vmatmul.mubr.f32.gmra.mrb[0].mxu0 %v1409
      %v1743 = vpop.f32.mrb[0].mxu0
      %v1744 = vadd.f32 %v1295, %v1743
      %v1745 = vpop.f32.mrb[0].mxu0
      %1746 = vmatprep.mubr.f32.mxu0 0.0
      %1747 = vmatmul.mubr.f32.gmra.mrb[0].mxu0 %v1412
      %v1748 = vpop.f32.mrb[0].mxu0
      %v1749 = vadd.f32 %v1295, %v1748
      %v1750 = vpop.f32.mrb[0].mxu0
      %1751 = vmatprep.mubr.f32.mxu0 0.0
      %1752 = vmatmul.mubr.f32.gmra.mrb[0].mxu0 %v1415
      %v1753 = vpop.f32.mrb[0].mxu0
      %v1754 = vadd.f32 %v1295, %v1753
      %v1755 = vpop.f32.mrb[0].mxu0
      %1756 = vmatprep.mubr.f32.mxu0 0.0
      %1757 = vmatmul.mubr.f32.gmra.mrb[0].mxu0 %v1418
      %v1758 = vpop.f32.mrb[0].mxu0
      %v1759 = vadd.f32 %v1295, %v1758
      %v1760 = vpop.f32.mrb[0].mxu0
      %1761 = vmatprep.mubr.f32.mxu0 0.0
      %1762 = vmatmul.mubr.f32.gmra.mrb[0].mxu0 %v1421
      %v1763 = vpop.f32.mrb[0].mxu0
      %v1764 = vadd.f32 %v1295, %v1763
      %v1765 = vpop.f32.mrb[0].mxu0
      %1766 = vmatprep.mubr.f32.mxu0 0.0
      %1767 = vmatmul.mubr.f32.gmra.mrb[0].mxu0 %v1424
      %v1768 = vpop.f32.mrb[0].mxu0
      %v1769 = vadd.f32 %v1295, %v1768
      %v1770 = vpop.f32.mrb[0].mxu0
      %1771 = vmatprep.mubr.f32.mxu0 0.0
      %1772 = vmatmul.mubr.f32.gmra.mrb[0].mxu0 %v1427
      %v1773 = vpop.f32.mrb[0].mxu0
      %v1774 = vadd.f32 %v1295, %v1773
      %v1775 = vpop.f32.mrb[0].mxu0
      %1776 = vmatprep.mubr.f32.mxu0 0.0
      %1777 = vmatmul.mubr.f32.gmra.mrb[0].mxu0 %v1430
      %v1778 = vpop.f32.mrb[0].mxu0
      %v1779 = vadd.f32 %v1295, %v1778
      %v1780 = vpop.f32.mrb[0].mxu0
      %1781 = vmatprep.mubr.f32.mxu0 0.0
      %1782 = vmatmul.mubr.f32.gmra.mrb[0].mxu0 %v1433
      %v1783 = vpop.f32.mrb[0].mxu0
      %v1784 = vadd.f32 %v1295, %v1783
      %v1785 = vpop.f32.mrb[0].mxu0
      %1786 = vmatprep.mubr.f32.mxu0 0.0
      %1787 = vmatmul.mubr.f32.gmra.mrb[0].mxu0 %v1436
      %v1788 = vpop.f32.mrb[0].mxu0
      %v1789 = vadd.f32 %v1295, %v1788
      %v1790 = vpop.f32.mrb[0].mxu0
      %1791 = vmatprep.mubr.f32.mxu0 0.0
      %1792 = vmatmul.mubr.f32.gmra.mrb[0].mxu0 %v1439
      %v1793 = vpop.f32.mrb[0].mxu0
      %v1794 = vadd.f32 %v1295, %v1793
      %v1795 = vpop.f32.mrb[0].mxu0
      %1796 = vmatprep.mubr.f32.mxu0 0.0
      %1797 = vmatmul.mubr.f32.gmra.mrb[0].mxu0 %v1442
      %v1798 = vpop.f32.mrb[0].mxu0
      %v1799 = vadd.f32 %v1295, %v1798
      %v1800 = vpop.f32.mrb[0].mxu0
      %1801 = vmatprep.mubr.f32.mxu0 0.0
      %1802 = vmatmul.mubr.f32.gmra.mrb[0].mxu0 %v1445
      %v1803 = vpop.f32.mrb[0].mxu0
      %v1804 = vadd.f32 %v1295, %v1803
      %v1805 = vpop.f32.mrb[0].mxu0
      %1806 = vmatprep.mubr.f32.mxu0 0.0
      %1807 = vmatmul.mubr.f32.gmra.mrb[0].mxu0 %v1448
      %v1808 = vpop.f32.mrb[0].mxu0
      %v1809 = vadd.f32 %v1295, %v1808
      %v1810 = vpop.f32.mrb[0].mxu0
      %1811 = vmatprep.mubr.f32.mxu0 0.0
      %1812 = vmatmul.mubr.f32.gmra.mrb[0].mxu0 %v1451
      %v1813 = vpop.f32.mrb[0].mxu0
      %v1814 = vadd.f32 %v1295, %v1813
      %v1815 = vpop.f32.mrb[0].mxu0
      %1816 = vmatprep.mubr.f32.mxu0 0.0
      %1817 = vmatmul.mubr.f32.gmra.mrb[0].mxu0 %v1454
      %v1818 = vpop.f32.mrb[0].mxu0
      %v1819 = vadd.f32 %v1295, %v1818
      %v1820 = vpop.f32.mrb[0].mxu0
      %1821 = vmatprep.mubr.f32.mxu0 0.0
      %1822 = vmatmul.mubr.f32.gmra.mrb[0].mxu0 %v1457
      %v1823 = vpop.f32.mrb[0].mxu0
      %v1824 = vadd.f32 %v1295, %v1823
      %v1825 = vpop.f32.mrb[0].mxu0
      %1826 = vmatprep.mubr.f32.mxu0 0.0
      %1827 = vmatmul.mubr.f32.gmra.mrb[0].mxu0 %v1460
      %v1828 = vpop.f32.mrb[0].mxu0
      %v1829 = vadd.f32 %v1295, %v1828
      %v1830 = vpop.f32.mrb[0].mxu0
      %1831 = vmatprep.mubr.f32.mxu0 0.0
      %1832 = vmatmul.mubr.f32.gmra.mrb[0].mxu0 %v1463
      %v1833 = vpop.f32.mrb[0].mxu0
      %v1834 = vadd.f32 %v1295, %v1833
      %v1835 = vpop.f32.mrb[0].mxu0
      %1836 = vmatprep.mubr.f32.mxu0 0.0
      %1837 = vmatmul.mubr.f32.gmra.mrb[0].mxu0 %v1466
      %v1838 = vpop.f32.mrb[0].mxu0
      %v1839 = vadd.f32 %v1295, %v1838
      %v1840 = vpop.f32.mrb[0].mxu0
      %1841 = vmatprep.mubr.f32.mxu0 0.0
      %1842 = vmatmul.mubr.f32.gmra.mrb[0].mxu0 %v1469
      %v1843 = vpop.f32.mrb[0].mxu0
      %v1844 = vadd.f32 %v1295, %v1843
      %v1845 = vpop.f32.mrb[0].mxu0
      %1846 = vmatprep.mubr.f32.mxu0 0.0
      %1847 = vmatmul.mubr.f32.gmra.mrb[0].mxu0 %v1472
      %v1848 = vpop.f32.mrb[0].mxu0
      %v1849 = vadd.f32 %v1295, %v1848
      %v1850 = vpop.f32.mrb[0].mxu0
      %1851 = vmatprep.mubr.f32.mxu0 0.0
      %1852 = vmatmul.mubr.f32.gmra.mrb[0].mxu0 %v1475
      %v1853 = vpop.f32.mrb[0].mxu0
      %v1854 = vadd.f32 %v1295, %v1853
      %v1855 = vpop.f32.mrb[0].mxu0
      %1856 = vmatprep.mubr.f32.mxu0 0.0
      %1857 = vmatmul.mubr.f32.gmra.mrb[0].mxu0 %v1478
      %v1858 = vpop.f32.mrb[0].mxu0
      %v1859 = vadd.f32 %v1295, %v1858
      %v1860 = vpop.f32.mrb[0].mxu0
      %1861 = vmatprep.mubr.f32.mxu0 0.0
      %1862 = vmatmul.mubr.f32.gmra.mrb[0].mxu0 %v1481
      %v1863 = vpop.f32.mrb[0].mxu0
      %v1864 = vadd.f32 %v1295, %v1863
      %v1865 = vpop.f32.mrb[0].mxu0
      %1866 = vmatprep.mubr.f32.mxu0 0.0
      %1867 = vmatmul.mubr.f32.gmra.mrb[0].mxu0 %v1484
      %v1868 = vpop.f32.mrb[0].mxu0
      %v1869 = vadd.f32 %v1295, %v1868
      %v1870 = vpop.f32.mrb[0].mxu0
      %1871 = vmatprep.mubr.f32.mxu0 0.0
      %1872 = vmatmul.mubr.f32.gmra.mrb[0].mxu0 %v1487
      %v1873 = vpop.f32.mrb[0].mxu0
      %v1874 = vadd.f32 %v1295, %v1873
      %v1875 = vpop.f32.mrb[0].mxu0
      %1876 = vdwg.mxu0
      %vm1877 = vcmask 39936
      %1878 = vst.msk [vmem:[%s226] sm:$0xff] %vm1877, %v1559
      %1879 = vst.msk [vmem:[%s226 + $0x8] sm:$0xff] %vm1877, %v1564
      %1880 = vst.msk [vmem:[%s226 + $0x10] sm:$0xff] %vm1877, %v1569
      %1881 = vst.msk [vmem:[%s226 + $0x18] sm:$0xff] %vm1877, %v1574
      %1882 = vst.msk [vmem:[%s226 + $0x20] sm:$0xff] %vm1877, %v1579
      %1883 = vst.msk [vmem:[%s226 + $0x28] sm:$0xff] %vm1877, %v1584
      %1884 = vst.msk [vmem:[%s226 + $0x30] sm:$0xff] %vm1877, %v1589
      %1885 = vst.msk [vmem:[%s226 + $0x38] sm:$0xff] %vm1877, %v1594
      %1886 = vst.msk [vmem:[%s226 + $0x40] sm:$0xff] %vm1877, %v1599
      %1887 = vst.msk [vmem:[%s226 + $0x48] sm:$0xff] %vm1877, %v1604
      %1888 = vst.msk [vmem:[%s226 + $0x50] sm:$0xff] %vm1877, %v1609
      %1889 = vst.msk [vmem:[%s226 + $0x58] sm:$0xff] %vm1877, %v1614
      %1890 = vst.msk [vmem:[%s226 + $0x60] sm:$0xff] %vm1877, %v1619
      %1891 = vst.msk [vmem:[%s226 + $0x68] sm:$0xff] %vm1877, %v1624
      %1892 = vst.msk [vmem:[%s226 + $0x70] sm:$0xff] %vm1877, %v1629
      %1893 = vst.msk [vmem:[%s226 + $0x78] sm:$0xff] %vm1877, %v1634
      %1894 = vst.msk [vmem:[%s226 + $0x80] sm:$0xff] %vm1877, %v1639
      %1895 = vst.msk [vmem:[%s226 + $0x88] sm:$0xff] %vm1877, %v1644
      %1896 = vst.msk [vmem:[%s226 + $0x90] sm:$0xff] %vm1877, %v1649
      %1897 = vst.msk [vmem:[%s226 + $0x98] sm:$0xff] %vm1877, %v1654
      %1898 = vst.msk [vmem:[%s226 + $0xa0] sm:$0xff] %vm1877, %v1659
      %1899 = vst.msk [vmem:[%s226 + $0xa8] sm:$0xff] %vm1877, %v1664
      %1900 = vst.msk [vmem:[%s226 + $0xb0] sm:$0xff] %vm1877, %v1669
      %1901 = vst.msk [vmem:[%s226 + $0xb8] sm:$0xff] %vm1877, %v1674
      %1902 = vst.msk [vmem:[%s226 + $0xc0] sm:$0xff] %vm1877, %v1679
      %1903 = vst.msk [vmem:[%s226 + $0xc8] sm:$0xff] %vm1877, %v1684
      %1904 = vst.msk [vmem:[%s226 + $0xd0] sm:$0xff] %vm1877, %v1689
      %1905 = vst.msk [vmem:[%s226 + $0xd8] sm:$0xff] %vm1877, %v1694
      %1906 = vst.msk [vmem:[%s226 + $0xe0] sm:$0xff] %vm1877, %v1699
      %1907 = vst.msk [vmem:[%s226 + $0xe8] sm:$0xff] %vm1877, %v1704
      %1908 = vst.msk [vmem:[%s226 + $0xf0] sm:$0xff] %vm1877, %v1709
      %1909 = vst.msk [vmem:[%s226 + $0xf8] sm:$0xff] %vm1877, %v1714
      %1910 = vst.msk [vmem:[%s226 + $0x100] sm:$0xff] %vm1877, %v1719
      %1911 = vst.msk [vmem:[%s226 + $0x108] sm:$0xff] %vm1877, %v1724
      %1912 = vst.msk [vmem:[%s226 + $0x110] sm:$0xff] %vm1877, %v1729
      %1913 = vst.msk [vmem:[%s226 + $0x118] sm:$0xff] %vm1877, %v1734
      %1914 = vst.msk [vmem:[%s226 + $0x120] sm:$0xff] %vm1877, %v1739
      %1915 = vst.msk [vmem:[%s226 + $0x128] sm:$0xff] %vm1877, %v1744
      %1916 = vst.msk [vmem:[%s226 + $0x130] sm:$0xff] %vm1877, %v1749
      %1917 = vst.msk [vmem:[%s226 + $0x138] sm:$0xff] %vm1877, %v1754
      %1918 = vst.msk [vmem:[%s226 + $0x140] sm:$0xff] %vm1877, %v1759
      %1919 = vst.msk [vmem:[%s226 + $0x148] sm:$0xff] %vm1877, %v1764
      %1920 = vst.msk [vmem:[%s226 + $0x150] sm:$0xff] %vm1877, %v1769
      %1921 = vst.msk [vmem:[%s226 + $0x158] sm:$0xff] %vm1877, %v1774
      %1922 = vst.msk [vmem:[%s226 + $0x160] sm:$0xff] %vm1877, %v1779
      %1923 = vst.msk [vmem:[%s226 + $0x168] sm:$0xff] %vm1877, %v1784
      %1924 = vst.msk [vmem:[%s226 + $0x170] sm:$0xff] %vm1877, %v1789
      %1925 = vst.msk [vmem:[%s226 + $0x178] sm:$0xff] %vm1877, %v1794
      %1926 = vst.msk [vmem:[%s226 + $0x180] sm:$0xff] %vm1877, %v1799
      %1927 = vst.msk [vmem:[%s226 + $0x188] sm:$0xff] %vm1877, %v1804
      %1928 = vst.msk [vmem:[%s226 + $0x190] sm:$0xff] %vm1877, %v1809
      %1929 = vst.msk [vmem:[%s226 + $0x198] sm:$0xff] %vm1877, %v1814
      %1930 = vst.msk [vmem:[%s226 + $0x1a0] sm:$0xff] %vm1877, %v1819
      %1931 = vst.msk [vmem:[%s226 + $0x1a8] sm:$0xff] %vm1877, %v1824
      %1932 = vst.msk [vmem:[%s226 + $0x1b0] sm:$0xff] %vm1877, %v1829
      %1933 = vst.msk [vmem:[%s226 + $0x1b8] sm:$0xff] %vm1877, %v1834
      %1934 = vst.msk [vmem:[%s226 + $0x1c0] sm:$0xff] %vm1877, %v1839
      %1935 = vst.msk [vmem:[%s226 + $0x1c8] sm:$0xff] %vm1877, %v1844
      %1936 = vst.msk [vmem:[%s226 + $0x1d0] sm:$0xff] %vm1877, %v1849
      %1937 = vst.msk [vmem:[%s226 + $0x1d8] sm:$0xff] %vm1877, %v1854
      %1938 = vst.msk [vmem:[%s226 + $0x1e0] sm:$0xff] %vm1877, %v1859
      %1939 = vst.msk [vmem:[%s226 + $0x1e8] sm:$0xff] %vm1877, %v1864
      %1940 = vst.msk [vmem:[%s226 + $0x1f0] sm:$0xff] %vm1877, %v1869
      %1941 = vst.msk [vmem:[%s226 + $0x1f8] sm:$0xff] %vm1877, %v1874
      %s1942 = smul.u32 64, %s16
      %p1943 = scmp.lt.s32.totalorder %s1942, 127
      %s1944 = scalar_select %p1943, %s1942, 127
      %s1945 = smul.addr %s1944, 8
      %s1946 = scalar_lea.vmem %s5, %s1945
      // Predicated region
      $region41: #{_fc_forward.1} parent=39 // pred_check
        %p1947 = pneg %p144
      $region42: #{_fc_forward.1} parent=39 // pred_check_branch
        %1949 = sbr.rel (%p1947) target = $region44
      $region43: #{_fc_forward.1} parent=39 // pred_region
        %s1950 = smul.u32 64, %s16
      $region44: #{_fc_forward.1} parent=39 // pred_fallthru
        _
    $region40: #{_fc_forward.1} parent=5 // pred_fallthru
      _
    %p1951 = scmp.le.s32.totalorder 2, %s11
    // Predicated region
    $region45: #{_fc_forward.1} parent=5 // pred_check
      %p1952 = pneg %p1951
    $region46: #{_fc_forward.1} parent=5 // pred_check_branch
      %1954 = sbr.rel (%p1952) target = $region48
    $region47: #{_fc_forward.1} parent=5 // pred_region
      %s1955 = ssub.s32 %s11, 2
      // Predicated region
      $region49: #{_fc_forward.1} parent=47 // pred_check
        %p1956 = pneg %p150
      $region50: #{_fc_forward.1} parent=47 // pred_check_branch
        %1958 = sbr.rel (%p1956) target = $region52
      $region51: #{_fc_forward.1} parent=47 // pred_region
        %s1959 = smul.u32 64, %s17
        %p1960 = scmp.lt.s32.totalorder %s1959, 127
        %s1961 = scalar_select %p1960, %s1959, 127
        %s1962 = smul.addr %s1961, 8
        %s1963 = scalar_lea.vmem %s5, %s1962
      $region52: #{_fc_forward.1} parent=47 // pred_fallthru
        _
    $region48: #{_fc_forward.1} parent=5 // pred_fallthru
      _
  $region6: #{_fc_forward.1} parent=0 // loop_footer
    %s15 = sadd.s32 1, %s11
  $region7: #{_fc_forward.1} parent=0 // loop_footer_branch
    %10 = sbr.rel target = $region3
  $region8: #{_fc_forward.1} parent=0 // loop_exit
    _

</llo_original>
